<compile_context>
chip_gen: v6e
topology: v6e:2x2x1
jax: 0.10.0
libtpu: 0.0.40
codegen_flags: <defaults>
</compile_context>

<pallas_src>
import functools

import jax
import jax.numpy as jnp
import numpy as np
from jax import lax
from jax.experimental import pallas as pl
from jax.experimental.pallas import tpu as pltpu


# ------------------------- kernel bodies -------------------------

def _qkv_proj_kernel(x_ref, wqkv_ref, qkv_ref):
    # x block: (1, S, F) f32; wqkv: (F, 3F) bf16, pre-transposed & grid-invariant.
    x = x_ref[0]                                                  # (S, F)
    qkv_ref[0] = jnp.dot(x.astype(jnp.bfloat16), wqkv_ref[...],
                         preferred_element_type=jnp.float32)      # (S, 3F)


def _attn_out_kernel(q_ref, k_ref, v_ref, res_ref, wfc3_ref, g_ref, b_ref,
                     o_ref, *, inv_scale, eps):
    # q/k/v blocks: (1, H, S, D); res: (1, S, F); wfc3: (H, D, F) bf16;
    # gamma/beta: (1, F).
    q = q_ref[0]                                                  # (H, S, D) f32
    k = k_ref[0]
    v = v_ref[0]

    # scores[h, s, t] = q[h, s, :] . k[h, t, :] * (1/sqrt(D))
    # dot_general contracts the last dims directly (no k.T); q/k kept f32 since
    # they feed exp().
    scores = lax.dot_general(
        q, k, dimension_numbers=(((2,), (2,)), ((0,), (0,))),
        preferred_element_type=jnp.float32) * inv_scale           # (H, S, S)

    m = jnp.max(scores, axis=-1, keepdims=True)
    e = jnp.exp(scores - m)
    p = e * pl.reciprocal(jnp.sum(e, axis=-1, keepdims=True), approx=True)

    # ctx[h, s, d] = sum_t p[h, s, t] * v[h, t, d]   (bf16 in, f32 acc)
    ctx = lax.dot_general(
        p.astype(jnp.bfloat16), v.astype(jnp.bfloat16),
        dimension_numbers=(((2,), (1,)), ((0,), (0,))),
        preferred_element_type=jnp.float32)                       # (H, S, D)

    # fc of the permuted+merged context without any transpose:
    #   y[s, o] = sum_{h,d} ctx[h, s, d] * WfcT[h*D+d, o] = sum_h (ctx[h] @ Wfc3[h])[s, o]
    yh = lax.dot_general(
        ctx.astype(jnp.bfloat16), wfc3_ref[...],
        dimension_numbers=(((2,), (1,)), ((0,), (0,))),
        preferred_element_type=jnp.float32)                       # (H, S, F)
    y = jnp.sum(yh, axis=0) + res_ref[0]          # dropout = identity (eval)

    # LayerNorm (biased variance, matching PyTorch), f32 VPU math.
    mean = jnp.mean(y, axis=-1, keepdims=True)
    var = jnp.mean(jnp.square(y - mean), axis=-1, keepdims=True)
    yn = (y - mean) * lax.rsqrt(var + eps)
    o_ref[0] = yn * g_ref[...] + b_ref[...]


# ------------------------- wrapper -------------------------

@functools.partial(jax.jit, static_argnums=(7,))
def attention_forward(x, wq, wk, wv, wfc, gamma, beta, num_head):
    B, S, F = x.shape
    D = F // num_head
    assert D * num_head == F

    # One-time weight prep: fuse q/k/v weights and pre-transpose everything to
    # (in, out) layout so the kernels never transpose; bf16 halves weight bytes.
    wqkv_t = jnp.concatenate([wq, wk, wv], axis=0).T.astype(jnp.bfloat16)  # (F, 3F)
    wfc3 = wfc.T.reshape(num_head, D, F).astype(jnp.bfloat16)              # (H, D, F)

    # --- fused q/k/v projection: one wide MXU matmul per batch ---
    qkv = pl.pallas_call(
        _qkv_proj_kernel,
        out_shape=jax.ShapeDtypeStruct((B, S, 3 * F), jnp.float32),
        grid=(B,),
        in_specs=[
            pl.BlockSpec((1, S, F), lambda b: (b, 0, 0)),
            pl.BlockSpec((F, 3 * F), lambda b: (0, 0)),
        ],
        out_specs=pl.BlockSpec((1, S, 3 * F), lambda b: (b, 0, 0)),
        compiler_params=pltpu.CompilerParams(dimension_semantics=("parallel",)),
    )(x, wqkv_t)

    # Module's raw `.view(B, H, -1, D)` (row-major reinterpret of each (S, F)
    # slab, NOT the usual reshape+transpose head split). HBM-side glue.
    qh = qkv[:, :, 0 * F:1 * F].reshape(B, num_head, S, D)
    kh = qkv[:, :, 1 * F:2 * F].reshape(B, num_head, S, D)
    vh = qkv[:, :, 2 * F:3 * F].reshape(B, num_head, S, D)

    # --- batched attention + fc(+permute fold) + residual + LayerNorm ---
    inv_scale = float(1.0 / np.sqrt(D))
    out = pl.pallas_call(
        functools.partial(_attn_out_kernel, inv_scale=inv_scale, eps=1e-5),
        out_shape=jax.ShapeDtypeStruct((B, S, F), jnp.float32),
        grid=(B,),
        in_specs=[
            pl.BlockSpec((1, num_head, S, D), lambda b: (b, 0, 0, 0)),
            pl.BlockSpec((1, num_head, S, D), lambda b: (b, 0, 0, 0)),
            pl.BlockSpec((1, num_head, S, D), lambda b: (b, 0, 0, 0)),
            pl.BlockSpec((1, S, F), lambda b: (b, 0, 0)),
            pl.BlockSpec((num_head, D, F), lambda b: (0, 0, 0)),
            pl.BlockSpec((1, F), lambda b: (0, 0)),
            pl.BlockSpec((1, F), lambda b: (0, 0)),
        ],
        out_specs=pl.BlockSpec((1, S, F), lambda b: (b, 0, 0)),
        compiler_params=pltpu.CompilerParams(dimension_semantics=("parallel",)),
    )(qh, kh, vh, x, wfc3, gamma, beta)
    return out


# ------------------------- pure-JAX reference (for correctness) -------------------------

def attention_reference(x, wq, wk, wv, wfc, gamma, beta, num_head):
    B, S, F = x.shape
    D = F // num_head
    q = x @ wq.T
    k = x @ wk.T
    v = x @ wv.T
    q = q.reshape(B, num_head, S, D)
    k = k.reshape(B, num_head, S, D)
    v = v.reshape(B, num_head, S, D)
    scale = np.sqrt(D)
    energy = jnp.einsum("bhsd,bhtd->bhst", q, k) / scale
    attn = jax.nn.softmax(energy, axis=-1)
    ctx = jnp.einsum("bhst,bhtd->bhsd", attn, v)
    ctx = ctx.transpose(0, 2, 1, 3).reshape(B, S, F)
    y = ctx @ wfc.T + x  # dropout = identity (eval)
    mean = y.mean(-1, keepdims=True)
    var = ((y - mean) ** 2).mean(-1, keepdims=True)
    return (y - mean) / jnp.sqrt(var + 1e-5) * gamma.reshape(-1) + beta.reshape(-1)


# ------------------------- main -------------------------

if __name__ == "__main__":
    B, S, F, H = 2, 8, 32, 4  # in_feature=32, num_head=4 -> size_per_head=8

    key = jax.random.PRNGKey(0)
    kx, kq, kk, kv, kf = jax.random.split(key, 5)

    x = jax.random.normal(kx, (B, S, F), dtype=jnp.float32)
    init = 1.0 / np.sqrt(F)
    wq = jax.random.normal(kq, (F, F), dtype=jnp.float32) * init
    wk = jax.random.normal(kk, (F, F), dtype=jnp.float32) * init
    wv = jax.random.normal(kv, (F, F), dtype=jnp.float32) * init
    wfc = jax.random.normal(kf, (F, F), dtype=jnp.float32) * init
    gamma = jnp.ones((1, F), dtype=jnp.float32)   # LayerNorm weight
    beta = jnp.zeros((1, F), dtype=jnp.float32)   # LayerNorm bias

    out = attention_forward(x, wq, wk, wv, wfc, gamma, beta, H)
    out = jax.block_until_ready(out)

    ref = attention_reference(x, wq, wk, wv, wfc, gamma, beta, H)
    assert out.shape == (B, S, F)
    assert np.allclose(np.asarray(out), np.asarray(ref), rtol=2e-2, atol=2e-2), \
        "Pallas output mismatch vs reference"

    print("KERNEL_OK")
</pallas_src>

<mosaic_0001>
module attributes {stable_mosaic.version = 11 : i64} {
  func.func @_qkv_proj_kernel(%arg0: i32, %arg1: memref<1x8x32xf32, #tpu.memory_space<vmem>>, %arg2: memref<32x96xbf16, #tpu.memory_space<vmem>>, %arg3: memref<1x8x96xf32, #tpu.memory_space<vmem>>) attributes {dimension_semantics = [#tpu.dimension_semantics<parallel>], iteration_bounds = array<i64: 2>, scalar_prefetch = 0 : i64, scratch_operands = 0 : i64, tpu.core_type = #tpu.core_type<tc>, window_params = [{transform_indices = @transform_0, window_bounds = array<i64: 1, 8, 32>}, {pipeline_mode = #tpu.pipeline_mode<synchronous>, transform_indices = @transform_1, window_bounds = array<i64: 32, 96>}, {transform_indices = @transform_2, window_bounds = array<i64: 1, 8, 96>}]} {
    %c0 = arith.constant 0 : index
    %c0_0 = arith.constant 0 : index
    %c0_1 = arith.constant 0 : index
    %0 = vector.load %arg1[%c0, %c0_0, %c0_1] : memref<1x8x32xf32, #tpu.memory_space<vmem>>, vector<1x8x32xf32>
    %1 = vector.shape_cast %0 : vector<1x8x32xf32> to vector<8x32xf32>
    %2 = arith.truncf %1 : vector<8x32xf32> to vector<8x32xbf16>
    %c0_2 = arith.constant 0 : index
    %c0_3 = arith.constant 0 : index
    %3 = vector.load %arg2[%c0_2, %c0_3] : memref<32x96xbf16, #tpu.memory_space<vmem>>, vector<32x96xbf16>
    %cst = arith.constant dense<0.000000e+00> : vector<8x96xf32>
    %4 = tpu.matmul %2, %3, %cst {dimension_numbers = #tpu.dot_dimension_numbers<[1], [0], [0], [1], [0, 0, 1, 1], [], []>} : vector<8x32xbf16>, vector<32x96xbf16>, vector<8x96xf32> -> vector<8x96xf32>
    %c0_4 = arith.constant 0 : index
    %c0_5 = arith.constant 0 : index
    %c0_6 = arith.constant 0 : index
    %5 = vector.load %arg3[%c0_4, %c0_5, %c0_6] : memref<1x8x96xf32, #tpu.memory_space<vmem>>, vector<1x8x96xf32>
    %6 = vector.shape_cast %5 : vector<1x8x96xf32> to vector<8x96xf32>
    %7 = vector.shape_cast %4 : vector<8x96xf32> to vector<1x8x96xf32>
    tpu.vector_store %arg3[%c0_4, %c0_5, %c0_6], %7 {strides = array<i32>} : memref<1x8x96xf32, #tpu.memory_space<vmem>>, vector<1x8x96xf32>,
    return
  }
  func.func @transform_0(%arg0: i32) -> (i32, i32, i32) {
    %c0_i32 = arith.constant 0 : i32
    %c0_i32_0 = arith.constant 0 : i32
    %c0_i32_1 = arith.constant 0 : i32
    return %arg0, %c0_i32, %c0_i32_0 : i32, i32, i32
  }
  func.func @transform_1(%arg0: i32) -> (i32, i32) {
    %c0_i32 = arith.constant 0 : i32
    %c0_i32_0 = arith.constant 0 : i32
    %c0_i32_1 = arith.constant 0 : i32
    return %c0_i32, %c0_i32_0 : i32, i32
  }
  func.func @transform_2(%arg0: i32) -> (i32, i32, i32) {
    %c0_i32 = arith.constant 0 : i32
    %c0_i32_0 = arith.constant 0 : i32
    %c0_i32_1 = arith.constant 0 : i32
    return %arg0, %c0_i32, %c0_i32_0 : i32, i32, i32
  }
}

module attributes {stable_mosaic.version = 11 : i64} {
  func.func @_attn_out_kernel(%arg0: i32, %arg1: memref<1x4x8x8xf32, #tpu.memory_space<vmem>>, %arg2: memref<1x4x8x8xf32, #tpu.memory_space<vmem>>, %arg3: memref<1x4x8x8xf32, #tpu.memory_space<vmem>>, %arg4: memref<1x8x32xf32, #tpu.memory_space<vmem>>, %arg5: memref<4x8x32xbf16, #tpu.memory_space<vmem>>, %arg6: memref<1x32xf32, #tpu.memory_space<vmem>>, %arg7: memref<1x32xf32, #tpu.memory_space<vmem>>, %arg8: memref<1x8x32xf32, #tpu.memory_space<vmem>>) attributes {dimension_semantics = [#tpu.dimension_semantics<parallel>], iteration_bounds = array<i64: 2>, scalar_prefetch = 0 : i64, scratch_operands = 0 : i64, tpu.core_type = #tpu.core_type<tc>, window_params = [{transform_indices = @transform_0, window_bounds = array<i64: 1, 4, 8, 8>}, {transform_indices = @transform_1, window_bounds = array<i64: 1, 4, 8, 8>}, {transform_indices = @transform_2, window_bounds = array<i64: 1, 4, 8, 8>}, {transform_indices = @transform_3, window_bounds = array<i64: 1, 8, 32>}, {pipeline_mode = #tpu.pipeline_mode<synchronous>, transform_indices = @transform_4, window_bounds = array<i64: 4, 8, 32>}, {pipeline_mode = #tpu.pipeline_mode<synchronous>, transform_indices = @transform_5, window_bounds = array<i64: 1, 32>}, {pipeline_mode = #tpu.pipeline_mode<synchronous>, transform_indices = @transform_6, window_bounds = array<i64: 1, 32>}, {transform_indices = @transform_7, window_bounds = array<i64: 1, 8, 32>}]} {
    %c0 = arith.constant 0 : index
    %c0_0 = arith.constant 0 : index
    %c0_1 = arith.constant 0 : index
    %c0_2 = arith.constant 0 : index
    %0 = vector.load %arg1[%c0, %c0_0, %c0_1, %c0_2] : memref<1x4x8x8xf32, #tpu.memory_space<vmem>>, vector<1x4x8x8xf32>
    %1 = vector.shape_cast %0 : vector<1x4x8x8xf32> to vector<4x8x8xf32>
    %c0_3 = arith.constant 0 : index
    %c0_4 = arith.constant 0 : index
    %c0_5 = arith.constant 0 : index
    %c0_6 = arith.constant 0 : index
    %2 = vector.load %arg2[%c0_3, %c0_4, %c0_5, %c0_6] : memref<1x4x8x8xf32, #tpu.memory_space<vmem>>, vector<1x4x8x8xf32>
    %3 = vector.shape_cast %2 : vector<1x4x8x8xf32> to vector<4x8x8xf32>
    %c0_7 = arith.constant 0 : index
    %c0_8 = arith.constant 0 : index
    %c0_9 = arith.constant 0 : index
    %c0_10 = arith.constant 0 : index
    %4 = vector.load %arg3[%c0_7, %c0_8, %c0_9, %c0_10] : memref<1x4x8x8xf32, #tpu.memory_space<vmem>>, vector<1x4x8x8xf32>
    %5 = vector.shape_cast %4 : vector<1x4x8x8xf32> to vector<4x8x8xf32>
    %cst = arith.constant dense<0.000000e+00> : vector<4x8x8xf32>
    %6 = tpu.matmul %1, %3, %cst {dimension_numbers = #tpu.dot_dimension_numbers<[2], [2], [1], [1], [0, 0, 0, 1, 1, 1], [0], [0]>} : vector<4x8x8xf32>, vector<4x8x8xf32>, vector<4x8x8xf32> -> vector<4x8x8xf32>
    %cst_11 = arith.constant 0.353553385 : f32
    %7 = vector.broadcast %cst_11 : f32 to vector<4x8x8xf32>
    %8 = arith.mulf %6, %7 : vector<4x8x8xf32>
    %cst_12 = arith.constant dense<0xFF800000> : vector<4x8xf32>
    %9 = vector.multi_reduction <maximumf>, %8, %cst_12 [2] : vector<4x8x8xf32> to vector<4x8xf32>
    %10 = vector.shape_cast %9 : vector<4x8xf32> to vector<4x8x1xf32>
    %11 = vector.broadcast %10 : vector<4x8x1xf32> to vector<4x8x8xf32>
    %12 = arith.subf %8, %11 : vector<4x8x8xf32>
    %13 = math.exp %12 : vector<4x8x8xf32>
    %cst_13 = arith.constant dense<0.000000e+00> : vector<4x8xf32>
    %14 = vector.multi_reduction <add>, %13, %cst_13 [2] : vector<4x8x8xf32> to vector<4x8xf32>
    %15 = vector.shape_cast %14 : vector<4x8xf32> to vector<4x8x1xf32>
    %16 = tpu.reciprocal %15 {approx = true} : vector<4x8x1xf32> -> vector<4x8x1xf32>
    %17 = vector.broadcast %16 : vector<4x8x1xf32> to vector<4x8x8xf32>
    %18 = arith.mulf %13, %17 : vector<4x8x8xf32>
    %19 = arith.truncf %18 : vector<4x8x8xf32> to vector<4x8x8xbf16>
    %20 = arith.truncf %5 : vector<4x8x8xf32> to vector<4x8x8xbf16>
    %cst_14 = arith.constant dense<0.000000e+00> : vector<4x8x8xf32>
    %21 = tpu.matmul %19, %20, %cst_14 {dimension_numbers = #tpu.dot_dimension_numbers<[2], [1], [1], [2], [0, 0, 0, 1, 1, 2], [0], [0]>} : vector<4x8x8xbf16>, vector<4x8x8xbf16>, vector<4x8x8xf32> -> vector<4x8x8xf32>
    %22 = arith.truncf %21 : vector<4x8x8xf32> to vector<4x8x8xbf16>
    %c0_15 = arith.constant 0 : index
    %c0_16 = arith.constant 0 : index
    %c0_17 = arith.constant 0 : index
    %23 = vector.load %arg5[%c0_15, %c0_16, %c0_17] : memref<4x8x32xbf16, #tpu.memory_space<vmem>>, vector<4x8x32xbf16>
    %cst_18 = arith.constant dense<0.000000e+00> : vector<4x8x32xf32>
    %24 = tpu.matmul %22, %23, %cst_18 {dimension_numbers = #tpu.dot_dimension_numbers<[2], [1], [1], [2], [0, 0, 0, 1, 1, 2], [0], [0]>} : vector<4x8x8xbf16>, vector<4x8x32xbf16>, vector<4x8x32xf32> -> vector<4x8x32xf32>
    %cst_19 = arith.constant dense<0.000000e+00> : vector<8x32xf32>
    %25 = vector.multi_reduction <add>, %24, %cst_19 [0] : vector<4x8x32xf32> to vector<8x32xf32>
    %c0_20 = arith.constant 0 : index
    %c0_21 = arith.constant 0 : index
    %c0_22 = arith.constant 0 : index
    %26 = vector.load %arg4[%c0_20, %c0_21, %c0_22] : memref<1x8x32xf32, #tpu.memory_space<vmem>>, vector<1x8x32xf32>
    %27 = vector.shape_cast %26 : vector<1x8x32xf32> to vector<8x32xf32>
    %28 = arith.addf %25, %27 : vector<8x32xf32>
    %cst_23 = arith.constant dense<0.000000e+00> : vector<8xf32>
    %29 = vector.multi_reduction <add>, %28, %cst_23 [1] : vector<8x32xf32> to vector<8xf32>
    %30 = vector.shape_cast %29 : vector<8xf32> to vector<8x1xf32>
    %cst_24 = arith.constant 3.200000e+01 : f32
    %31 = vector.broadcast %cst_24 : f32 to vector<8x1xf32>
    %32 = arith.divf %30, %31 : vector<8x1xf32>
    %33 = vector.broadcast %32 : vector<8x1xf32> to vector<8x32xf32>
    %34 = arith.subf %28, %33 : vector<8x32xf32>
    %35 = arith.mulf %34, %34 : vector<8x32xf32>
    %cst_25 = arith.constant dense<0.000000e+00> : vector<8xf32>
    %36 = vector.multi_reduction <add>, %35, %cst_25 [1] : vector<8x32xf32> to vector<8xf32>
    %37 = vector.shape_cast %36 : vector<8xf32> to vector<8x1xf32>
    %cst_26 = arith.constant 3.200000e+01 : f32
    %38 = vector.broadcast %cst_26 : f32 to vector<8x1xf32>
    %39 = arith.divf %37, %38 : vector<8x1xf32>
    %40 = vector.broadcast %32 : vector<8x1xf32> to vector<8x32xf32>
    %41 = arith.subf %28, %40 : vector<8x32xf32>
    %cst_27 = arith.constant 9.99999974E-6 : f32
    %42 = vector.broadcast %cst_27 : f32 to vector<8x1xf32>
    %43 = arith.addf %39, %42 : vector<8x1xf32>
    %44 = math.rsqrt %43 : vector<8x1xf32>
    %45 = vector.broadcast %44 : vector<8x1xf32> to vector<8x32xf32>
    %46 = arith.mulf %41, %45 : vector<8x32xf32>
    %c0_28 = arith.constant 0 : index
    %c0_29 = arith.constant 0 : index
    %47 = vector.load %arg6[%c0_28, %c0_29] : memref<1x32xf32, #tpu.memory_space<vmem>>, vector<1x32xf32>
    %48 = vector.broadcast %47 : vector<1x32xf32> to vector<8x32xf32>
    %49 = arith.mulf %46, %48 : vector<8x32xf32>
    %c0_30 = arith.constant 0 : index
    %c0_31 = arith.constant 0 : index
    %50 = vector.load %arg7[%c0_30, %c0_31] : memref<1x32xf32, #tpu.memory_space<vmem>>, vector<1x32xf32>
    %51 = vector.broadcast %50 : vector<1x32xf32> to vector<8x32xf32>
    %52 = arith.addf %49, %51 : vector<8x32xf32>
    %c0_32 = arith.constant 0 : index
    %c0_33 = arith.constant 0 : index
    %c0_34 = arith.constant 0 : index
    %53 = vector.load %arg8[%c0_32, %c0_33, %c0_34] : memref<1x8x32xf32, #tpu.memory_space<vmem>>, vector<1x8x32xf32>
    %54 = vector.shape_cast %53 : vector<1x8x32xf32> to vector<8x32xf32>
    %55 = vector.shape_cast %52 : vector<8x32xf32> to vector<1x8x32xf32>
    tpu.vector_store %arg8[%c0_32, %c0_33, %c0_34], %55 {strides = array<i32>} : memref<1x8x32xf32, #tpu.memory_space<vmem>>, vector<1x8x32xf32>,
    return
  }
  func.func @transform_0(%arg0: i32) -> (i32, i32, i32, i32) {
    %c0_i32 = arith.constant 0 : i32
    %c0_i32_0 = arith.constant 0 : i32
    %c0_i32_1 = arith.constant 0 : i32
    %c0_i32_2 = arith.constant 0 : i32
    return %arg0, %c0_i32, %c0_i32_0, %c0_i32_1 : i32, i32, i32, i32
  }
  func.func @transform_1(%arg0: i32) -> (i32, i32, i32, i32) {
    %c0_i32 = arith.constant 0 : i32
    %c0_i32_0 = arith.constant 0 : i32
    %c0_i32_1 = arith.constant 0 : i32
    %c0_i32_2 = arith.constant 0 : i32
    return %arg0, %c0_i32, %c0_i32_0, %c0_i32_1 : i32, i32, i32, i32
  }
  func.func @transform_2(%arg0: i32) -> (i32, i32, i32, i32) {
    %c0_i32 = arith.constant 0 : i32
    %c0_i32_0 = arith.constant 0 : i32
    %c0_i32_1 = arith.constant 0 : i32
    %c0_i32_2 = arith.constant 0 : i32
    return %arg0, %c0_i32, %c0_i32_0, %c0_i32_1 : i32, i32, i32, i32
  }
  func.func @transform_3(%arg0: i32) -> (i32, i32, i32) {
    %c0_i32 = arith.constant 0 : i32
    %c0_i32_0 = arith.constant 0 : i32
    %c0_i32_1 = arith.constant 0 : i32
    return %arg0, %c0_i32, %c0_i32_0 : i32, i32, i32
  }
  func.func @transform_4(%arg0: i32) -> (i32, i32, i32) {
    %c0_i32 = arith.constant 0 : i32
    %c0_i32_0 = arith.constant 0 : i32
    %c0_i32_1 = arith.constant 0 : i32
    %c0_i32_2 = arith.constant 0 : i32
    return %c0_i32, %c0_i32_0, %c0_i32_1 : i32, i32, i32
  }
  func.func @transform_5(%arg0: i32) -> (i32, i32) {
    %c0_i32 = arith.constant 0 : i32
    %c0_i32_0 = arith.constant 0 : i32
    %c0_i32_1 = arith.constant 0 : i32
    return %c0_i32, %c0_i32_0 : i32, i32
  }
  func.func @transform_6(%arg0: i32) -> (i32, i32) {
    %c0_i32 = arith.constant 0 : i32
    %c0_i32_0 = arith.constant 0 : i32
    %c0_i32_1 = arith.constant 0 : i32
    return %c0_i32, %c0_i32_0 : i32, i32
  }
  func.func @transform_7(%arg0: i32) -> (i32, i32, i32) {
    %c0_i32 = arith.constant 0 : i32
    %c0_i32_0 = arith.constant 0 : i32
    %c0_i32_1 = arith.constant 0 : i32
    return %arg0, %c0_i32, %c0_i32_0 : i32, i32, i32
  }
}

</mosaic_0001>

<llo_original>
// kernel: attention_forward.2
$region0: #{attention_forward.2}
  #allocation0 [shape = 'u32[]', space=smem, size = 0x4, offset = 0x4, fixed_abs, tag = 'smem constant byte address 0x4 - core index']
  #allocation1 [shape = 'u32[144,128]{1,0:T(1,128)}', space=vmem, size = 0x12000, scoped, tag = 'internal scratch']
  %s0 = inlined_call_operand.vmem [shape: f32[2,8,32], index: 0, kind: input, shape index: {}]
  %s1 = inlined_call_operand.vmem [shape: bf16[32,96], index: 1, kind: input, shape index: {}]
  %s2 = inlined_call_operand.vmem [shape: f32[2,8,96], index: 2, kind: output, shape index: {}]
  %s3 = sld [smem:[#allocation0]]
  $region41: #{attention_forward.2} parent=0
    _
  %s5 = ssub.s32 1, %s3
  %s6 = scalar_select 0, %s5, %s3
  loop: start=0, step=1, limit=4
  $region2: #{attention_forward.2} parent=0 // loop_pre_header
    _
  $region3: #{attention_forward.2} parent=0 // loop_header
    %s8 = sphi 0, %s12
    %p9 = scmp.ge.s32.totalorder %s8, 4
    %s18 = sphi 0, %s20
    %s21 = sphi 0, %s18
    %s22 = sphi 0, %s21
    %s38 = sphi 0, %s22
    %s42 = sphi 0, %s42
    %s44 = sphi 0, %s42
    %s45 = sphi 0, %s44
    %s59 = sphi 0, %s45
    %s65 = sphi 0, %s67
    %s68 = sphi 0, %s65
    %s69 = sphi 0, %s68
    %s85 = sphi 0, %s69
  $region4: #{attention_forward.2} parent=0 // loop_header_branch
    %11 = sbr.rel (%p9) target = $region8
  $region5: #{attention_forward.2} parent=0 // loop_body
    %s13 = ssub.s32 %s8, 1
    %s14 = ssub.s32 %s8, 2
    %s15 = sadd.s32 %s8, 1
    %s16 = ssub.s32 %s8, %s15
    %p17 = scmp.eq.s32.totalorder %s16, 0
    %s19 = sadd.s32 %s18, 1
    %s20 = scalar_select %p17, %s18, %s19
    %p23 = pneg %p17
    %p24 = scmp.eq.s32.totalorder %s8, 1
    %p25 = por %p23, %p24
    %p26 = scmp.ne.s32.totalorder %s18, %s21
    %p27 = scmp.eq.s32.totalorder %s8, 0
    %p28 = por %p26, %p27
    %p29 = scmp.ne.s32.totalorder %s18, %s21
    %p30 = scmp.eq.s32.totalorder %s13, 1
    %p31 = por %p29, %p30
    %p32 = scmp.ne.s32.totalorder %s21, %s22
    %p33 = scmp.eq.s32.totalorder %s13, 0
    %p34 = por %p32, %p33
    %p35 = scmp.ne.s32.totalorder %s21, %s22
    %p36 = scmp.eq.s32.totalorder %s14, 1
    %p37 = por %p35, %p36
    %p39 = scmp.ne.s32.totalorder %s22, %s38
    %p40 = scmp.eq.s32.totalorder %s14, 0
    %p41 = por %p39, %p40
    %s43 = sadd.s32 %s42, 1
    %p46 = scmp.eq.s32.totalorder %s8, 1
    %p47 = scmp.ne.s32.totalorder %s42, %s44
    %p48 = scmp.eq.s32.totalorder %s8, 0
    %p49 = por %p47, %p48
    %p50 = scmp.ne.s32.totalorder %s42, %s44
    %p51 = scmp.eq.s32.totalorder %s13, 1
    %p52 = por %p50, %p51
    %p53 = scmp.ne.s32.totalorder %s44, %s45
    %p54 = scmp.eq.s32.totalorder %s13, 0
    %p55 = por %p53, %p54
    %p56 = scmp.ne.s32.totalorder %s44, %s45
    %p57 = scmp.eq.s32.totalorder %s14, 1
    %p58 = por %p56, %p57
    %p60 = scmp.ne.s32.totalorder %s45, %s59
    %p61 = scmp.eq.s32.totalorder %s14, 0
    %p62 = por %p60, %p61
    %s63 = ssub.s32 %s8, %s15
    %p64 = scmp.eq.s32.totalorder %s63, 0
    %s66 = sadd.s32 %s65, 1
    %s67 = scalar_select %p64, %s65, %s66
    %p70 = pneg %p64
    %p71 = scmp.eq.s32.totalorder %s8, 1
    %p72 = por %p70, %p71
    %p73 = scmp.ne.s32.totalorder %s65, %s68
    %p74 = scmp.eq.s32.totalorder %s8, 0
    %p75 = por %p73, %p74
    %p76 = scmp.ne.s32.totalorder %s65, %s68
    %p77 = scmp.eq.s32.totalorder %s13, 1
    %p78 = por %p76, %p77
    %p79 = scmp.ne.s32.totalorder %s68, %s69
    %p80 = scmp.eq.s32.totalorder %s13, 0
    %p81 = por %p79, %p80
    %p82 = scmp.ne.s32.totalorder %s68, %s69
    %p83 = scmp.eq.s32.totalorder %s14, 1
    %p84 = por %p82, %p83
    %p86 = scmp.ne.s32.totalorder %s69, %s85
    %p87 = scmp.eq.s32.totalorder %s14, 0
    %p88 = por %p86, %p87
    %p89 = scmp.le.s32.totalorder 1, %s8
    %p90 = scmp.lt.s32.totalorder %s8, 3
    %p91 = pnand %p89, %p90
    %p92 = pneg %p91
    // Predicated region
    $region9: #{attention_forward.2} parent=5 // pred_check
      _
    $region10: #{attention_forward.2} parent=5 // pred_check_branch
      %94 = sbr.rel (%p91) target = $region12
    $region11: #{attention_forward.2} parent=5 // pred_region
      %s95 = ssub.s32 %s8, 1
      // Predicated region
      $region13: #{attention_forward.2} parent=11 // pred_check
        %p96 = pneg %p55
      $region14: #{attention_forward.2} parent=11 // pred_check_branch
        %98 = sbr.rel (%p96) target = $region16
      $region15: #{attention_forward.2} parent=11 // pred_region
        _
      $region16: #{attention_forward.2} parent=11 // pred_fallthru
        _
    $region12: #{attention_forward.2} parent=5 // pred_fallthru
      _
    %p99 = scmp.lt.s32.totalorder %s8, 2
    // Predicated region
    $region17: #{attention_forward.2} parent=5 // pred_check
      %p100 = pneg %p99
    $region18: #{attention_forward.2} parent=5 // pred_check_branch
      %102 = sbr.rel (%p100) target = $region20
    $region19: #{attention_forward.2} parent=5 // pred_region
      // Predicated region
      $region21: #{attention_forward.2} parent=19 // pred_check
        %p103 = pneg %p28
      $region22: #{attention_forward.2} parent=19 // pred_check_branch
        %105 = sbr.rel (%p103) target = $region24
      $region23: #{attention_forward.2} parent=19 // pred_region
        %p106 = scmp.lt.s32.totalorder %s8, 1
        %s107 = scalar_select %p106, %s8, 1
        %s108 = smul.addr %s107, 8
        %s109 = scalar_lea.vmem %s0, %s108
      $region24: #{attention_forward.2} parent=19 // pred_fallthru
        _
    $region20: #{attention_forward.2} parent=5 // pred_fallthru
      _
    %p110 = scmp.le.s32.totalorder 1, %s8
    %p111 = scmp.lt.s32.totalorder %s8, 3
    %p112 = pnand %p110, %p111
    %p113 = pneg %p112
    // Predicated region
    $region25: #{attention_forward.2} parent=5 // pred_check
      _
    $region26: #{attention_forward.2} parent=5 // pred_check_branch
      %115 = sbr.rel (%p112) target = $region28
    $region27: #{attention_forward.2} parent=5 // pred_region
      %s116 = ssub.s32 %s8, 1
      %p117 = scmp.lt.s32.totalorder %s13, 1
      %s118 = scalar_select %p117, %s13, 1
      %s119 = smul.addr %s118, 8
      %s120 = scalar_lea.vmem %s0, %s119
      %p121 = pneg %p34
      %p122 = pneg %p31
      %p123 = pneg %p55
      %p124 = pneg %p52
      %p125 = pneg %p81
      %p126 = pneg %p78
      %p127 = scmp.lt.s32.totalorder %s13, 1
      %s128 = scalar_select %p127, %s13, 1
      %s129 = smul.addr %s128, 8
      %s130 = scalar_lea.vmem %s2, %s129
      %p131 = scmp.lt.s32.totalorder %s13, 1
      %s132 = scalar_select %p131, %s13, 1
      %s133 = smul.addr %s132, 8
      %s134 = scalar_lea.vmem %s0, %s133
      %p135 = scmp.lt.s32.totalorder %s13, 1
      %s136 = scalar_select %p135, %s13, 1
      %s137 = smul.addr %s136, 8
      %s138 = scalar_lea.vmem %s2, %s137
      %v140 = vld [vmem:[%s134] sm:$0xff]
      %v141 = vpack.c.bf16 %v140, %v140
      %v142 = vld [vmem:[%s1] sm:$0xf]
      %v143 = vld [vmem:[%s1 + $0x4] sm:$0xf]
      %v144 = vld [vmem:[%s1 + $0x8] sm:$0xf]
      %v145 = vld [vmem:[%s1 + $0xc] sm:$0xf]
      %v150 = vunpack.c.l.b16 %v142
      %v151 = vunpack.c.l.b16 %v143
      %v152 = vunpack.c.l.b16 %v144
      %v153 = vunpack.c.l.b16 %v145
      %v154 = vpack.c.b16 %v151, %v150
      %v155 = vpack.c.b16 %v153, %v152
      %vm158 = vcmask 261120
      %v160 = vsel %vm158, %v141, 0
      %162 = vmatprep.subr.bf16.mxu0 0
      %163 = vmatpush1.bf16.msra.mxu0 0
      %164 = vmatprep.subr.bf16.mxu0 0
      %165 = vmatpush1.bf16.msra.mxu0 0
      %166 = vmatprep.subr.bf16.mxu0 0
      %167 = vmatpush1.bf16.msra.mxu0 0
      %168 = vmatprep.subr.bf16.mxu0 0
      %169 = vmatpush1.bf16.msra.mxu0 0
      %170 = vmatprep.subr.bf16.mxu0 0
      %171 = vmatpush1.bf16.msra.mxu0 0
      %172 = vmatprep.subr.bf16.mxu0 0
      %173 = vmatpush1.bf16.msra.mxu0 0
      %174 = vmatprep.subr.bf16.mxu0 0
      %175 = vmatpush1.bf16.msra.mxu0 %v155
      %176 = vmatprep.subr.bf16.mxu0 0
      %177 = vmatpush1.bf16.msra.mxu0 %v154
      %178 = vmatprep.subr.bf16.mxu0 0
      %179 = vmatpush2.bf16.msra.mxu0 0
      %180 = vmatprep.subr.bf16.mxu0 0
      %181 = vmatpush2.bf16.msra.mxu0 0
      %182 = vmatprep.subr.bf16.mxu0 0
      %183 = vmatpush2.bf16.msra.mxu0 0
      %184 = vmatprep.subr.bf16.mxu0 0
      %185 = vmatpush2.bf16.msra.mxu0 0
      %186 = vmatprep.subr.bf16.mxu0 0
      %187 = vmatpush2.bf16.msra.mxu0 0
      %188 = vmatprep.subr.bf16.mxu0 0
      %189 = vmatpush2.bf16.msra.mxu0 0
      %190 = vmatprep.subr.bf16.mxu0 0
      %191 = vmatpush2.bf16.msra.mxu0 0
      %192 = vmatprep.subr.bf16.mxu0 0
      %193 = vmatpush2.bf16.msra.mxu0 0
      %194 = vmatprep.mubr.bf16.mxu0 0
      %195 = vmatmul.mubr.bf16.gmra.mxu0 %v160
      %v196 = vpop.f32.mrf.mxu0
      %v197 = vadd.f32 0.0, %v196
      %v198 = vpop.f32.mrf.mxu0
      %v199 = vpop.f32.mrf.mxu0
      %v200 = vpop.f32.mrf.mxu0
      %201 = vdwg.mxu0
      %vm202 = vcmask 785408
      %203 = vst.msk [vmem:[%s138] sm:$0xff] %vm202, %v197
      %p204 = scmp.lt.s32.totalorder %s13, 1
      %s205 = scalar_select %p204, %s13, 1
      %s206 = smul.addr %s205, 8
      %s207 = scalar_lea.vmem %s2, %s206
      // Predicated region
      $region29: #{attention_forward.2} parent=27 // pred_check
        %p208 = pneg %p78
      $region30: #{attention_forward.2} parent=27 // pred_check_branch
        %210 = sbr.rel (%p208) target = $region32
      $region31: #{attention_forward.2} parent=27 // pred_region
        _
      $region32: #{attention_forward.2} parent=27 // pred_fallthru
        _
    $region28: #{attention_forward.2} parent=5 // pred_fallthru
      _
    %p211 = scmp.le.s32.totalorder 2, %s8
    // Predicated region
    $region33: #{attention_forward.2} parent=5 // pred_check
      %p212 = pneg %p211
    $region34: #{attention_forward.2} parent=5 // pred_check_branch
      %214 = sbr.rel (%p212) target = $region36
    $region35: #{attention_forward.2} parent=5 // pred_region
      %s215 = ssub.s32 %s8, 2
      // Predicated region
      $region37: #{attention_forward.2} parent=35 // pred_check
        %p216 = pneg %p84
      $region38: #{attention_forward.2} parent=35 // pred_check_branch
        %218 = sbr.rel (%p216) target = $region40
      $region39: #{attention_forward.2} parent=35 // pred_region
        %p219 = scmp.lt.s32.totalorder %s14, 1
        %s220 = scalar_select %p219, %s14, 1
        %s221 = smul.addr %s220, 8
        %s222 = scalar_lea.vmem %s2, %s221
      $region40: #{attention_forward.2} parent=35 // pred_fallthru
        _
    $region36: #{attention_forward.2} parent=5 // pred_fallthru
      _
  $region6: #{attention_forward.2} parent=0 // loop_footer
    %s12 = sadd.s32 1, %s8
  $region7: #{attention_forward.2} parent=0 // loop_footer_branch
    %7 = sbr.rel target = $region3
  $region8: #{attention_forward.2} parent=0 // loop_exit
    _

// kernel: attention_forward.3
$region0: #{attention_forward.3}
  #allocation0 [shape = 'u32[]', space=smem, size = 0x4, offset = 0x4, fixed_abs, tag = 'smem constant byte address 0x4 - core index']
  #allocation1 [shape = 'u32[144,128]{1,0:T(1,128)}', space=vmem, size = 0x12000, scoped, tag = 'internal scratch']
  %s0 = inlined_call_operand.vmem [shape: f32[2,4,8,8], index: 0, kind: input, shape index: {}]
  %s1 = inlined_call_operand.vmem [shape: f32[2,4,8,8], index: 1, kind: input, shape index: {}]
  %s2 = inlined_call_operand.vmem [shape: f32[2,4,8,8], index: 2, kind: input, shape index: {}]
  %s3 = inlined_call_operand.vmem [shape: f32[2,8,32], index: 3, kind: input, shape index: {}]
  %s4 = inlined_call_operand.vmem [shape: bf16[4,8,32], index: 4, kind: input, shape index: {}]
  %s5 = inlined_call_operand.vmem [shape: f32[1,32], index: 5, kind: input, shape index: {}]
  %s6 = inlined_call_operand.vmem [shape: f32[1,32], index: 6, kind: input, shape index: {}]
  %s7 = inlined_call_operand.hbm [shape: f32[2,8,32], index: 7, kind: output, shape index: {}]
  %s8 = sld [smem:[#allocation0]]
  $region61: #{attention_forward.3} parent=0
    _
  %s10 = ssub.s32 1, %s8
  %s11 = scalar_select 0, %s10, %s8
  $region1: #{attention_forward.3} parent=0
    #allocation2 [shape = 'u8[8192]{0}', space=vmem, size = 0x2000, scoped, tag = 'output window, operand 0']
    #allocation3 [shape = 's32[2]{0}', space=sflag, size = 0x8, scoped, tag = 'scoped memory for attention_forward.3']
    %12 = vsyncpa [#allocation3], 0
    %s13 = scalar_lea.sflag [#allocation3], 1
    %14 = vsyncpa %s13, 0
    loop: start=0, step=1, limit=4
    $region2: #{attention_forward.3} parent=1 // loop_pre_header
      _
    $region3: #{attention_forward.3} parent=1 // loop_header
      %s16 = sphi 0, %s20
      %p17 = scmp.ge.s32.totalorder %s16, 4
      %s26 = sphi 0, %s28
      %s29 = sphi 0, %s26
      %s30 = sphi 0, %s29
      %s46 = sphi 0, %s30
      %s52 = sphi 0, %s54
      %s55 = sphi 0, %s52
      %s56 = sphi 0, %s55
      %s72 = sphi 0, %s56
      %s78 = sphi 0, %s80
      %s81 = sphi 0, %s78
      %s82 = sphi 0, %s81
      %s98 = sphi 0, %s82
      %s104 = sphi 0, %s106
      %s107 = sphi 0, %s104
      %s108 = sphi 0, %s107
      %s124 = sphi 0, %s108
      %s128 = sphi 0, %s128
      %s130 = sphi 0, %s128
      %s131 = sphi 0, %s130
      %s145 = sphi 0, %s131
      %s149 = sphi 0, %s149
      %s151 = sphi 0, %s149
      %s152 = sphi 0, %s151
      %s166 = sphi 0, %s152
      %s170 = sphi 0, %s170
      %s172 = sphi 0, %s170
      %s173 = sphi 0, %s172
      %s187 = sphi 0, %s173
      %s193 = sphi 0, %s195
      %s196 = sphi 0, %s193
      %s197 = sphi 0, %s196
      %s213 = sphi 0, %s197
    $region4: #{attention_forward.3} parent=1 // loop_header_branch
      %19 = sbr.rel (%p17) target = $region8
    $region5: #{attention_forward.3} parent=1 // loop_body
      %s21 = ssub.s32 %s16, 1
      %s22 = ssub.s32 %s16, 2
      %s23 = sadd.s32 %s16, 1
      %s24 = ssub.s32 %s16, %s23
      %p25 = scmp.eq.s32.totalorder %s24, 0
      %s27 = sadd.s32 %s26, 1
      %s28 = scalar_select %p25, %s26, %s27
      %p31 = pneg %p25
      %p32 = scmp.eq.s32.totalorder %s16, 1
      %p33 = por %p31, %p32
      %p34 = scmp.ne.s32.totalorder %s26, %s29
      %p35 = scmp.eq.s32.totalorder %s16, 0
      %p36 = por %p34, %p35
      %p37 = scmp.ne.s32.totalorder %s26, %s29
      %p38 = scmp.eq.s32.totalorder %s21, 1
      %p39 = por %p37, %p38
      %p40 = scmp.ne.s32.totalorder %s29, %s30
      %p41 = scmp.eq.s32.totalorder %s21, 0
      %p42 = por %p40, %p41
      %p43 = scmp.ne.s32.totalorder %s29, %s30
      %p44 = scmp.eq.s32.totalorder %s22, 1
      %p45 = por %p43, %p44
      %p47 = scmp.ne.s32.totalorder %s30, %s46
      %p48 = scmp.eq.s32.totalorder %s22, 0
      %p49 = por %p47, %p48
      %s50 = ssub.s32 %s16, %s23
      %p51 = scmp.eq.s32.totalorder %s50, 0
      %s53 = sadd.s32 %s52, 1
      %s54 = scalar_select %p51, %s52, %s53
      %p57 = pneg %p51
      %p58 = scmp.eq.s32.totalorder %s16, 1
      %p59 = por %p57, %p58
      %p60 = scmp.ne.s32.totalorder %s52, %s55
      %p61 = scmp.eq.s32.totalorder %s16, 0
      %p62 = por %p60, %p61
      %p63 = scmp.ne.s32.totalorder %s52, %s55
      %p64 = scmp.eq.s32.totalorder %s21, 1
      %p65 = por %p63, %p64
      %p66 = scmp.ne.s32.totalorder %s55, %s56
      %p67 = scmp.eq.s32.totalorder %s21, 0
      %p68 = por %p66, %p67
      %p69 = scmp.ne.s32.totalorder %s55, %s56
      %p70 = scmp.eq.s32.totalorder %s22, 1
      %p71 = por %p69, %p70
      %p73 = scmp.ne.s32.totalorder %s56, %s72
      %p74 = scmp.eq.s32.totalorder %s22, 0
      %p75 = por %p73, %p74
      %s76 = ssub.s32 %s16, %s23
      %p77 = scmp.eq.s32.totalorder %s76, 0
      %s79 = sadd.s32 %s78, 1
      %s80 = scalar_select %p77, %s78, %s79
      %p83 = pneg %p77
      %p84 = scmp.eq.s32.totalorder %s16, 1
      %p85 = por %p83, %p84
      %p86 = scmp.ne.s32.totalorder %s78, %s81
      %p87 = scmp.eq.s32.totalorder %s16, 0
      %p88 = por %p86, %p87
      %p89 = scmp.ne.s32.totalorder %s78, %s81
      %p90 = scmp.eq.s32.totalorder %s21, 1
      %p91 = por %p89, %p90
      %p92 = scmp.ne.s32.totalorder %s81, %s82
      %p93 = scmp.eq.s32.totalorder %s21, 0
      %p94 = por %p92, %p93
      %p95 = scmp.ne.s32.totalorder %s81, %s82
      %p96 = scmp.eq.s32.totalorder %s22, 1
      %p97 = por %p95, %p96
      %p99 = scmp.ne.s32.totalorder %s82, %s98
      %p100 = scmp.eq.s32.totalorder %s22, 0
      %p101 = por %p99, %p100
      %s102 = ssub.s32 %s16, %s23
      %p103 = scmp.eq.s32.totalorder %s102, 0
      %s105 = sadd.s32 %s104, 1
      %s106 = scalar_select %p103, %s104, %s105
      %p109 = pneg %p103
      %p110 = scmp.eq.s32.totalorder %s16, 1
      %p111 = por %p109, %p110
      %p112 = scmp.ne.s32.totalorder %s104, %s107
      %p113 = scmp.eq.s32.totalorder %s16, 0
      %p114 = por %p112, %p113
      %p115 = scmp.ne.s32.totalorder %s104, %s107
      %p116 = scmp.eq.s32.totalorder %s21, 1
      %p117 = por %p115, %p116
      %p118 = scmp.ne.s32.totalorder %s107, %s108
      %p119 = scmp.eq.s32.totalorder %s21, 0
      %p120 = por %p118, %p119
      %p121 = scmp.ne.s32.totalorder %s107, %s108
      %p122 = scmp.eq.s32.totalorder %s22, 1
      %p123 = por %p121, %p122
      %p125 = scmp.ne.s32.totalorder %s108, %s124
      %p126 = scmp.eq.s32.totalorder %s22, 0
      %p127 = por %p125, %p126
      %s129 = sadd.s32 %s128, 1
      %p132 = scmp.eq.s32.totalorder %s16, 1
      %p133 = scmp.ne.s32.totalorder %s128, %s130
      %p134 = scmp.eq.s32.totalorder %s16, 0
      %p135 = por %p133, %p134
      %p136 = scmp.ne.s32.totalorder %s128, %s130
      %p137 = scmp.eq.s32.totalorder %s21, 1
      %p138 = por %p136, %p137
      %p139 = scmp.ne.s32.totalorder %s130, %s131
      %p140 = scmp.eq.s32.totalorder %s21, 0
      %p141 = por %p139, %p140
      %p142 = scmp.ne.s32.totalorder %s130, %s131
      %p143 = scmp.eq.s32.totalorder %s22, 1
      %p144 = por %p142, %p143
      %p146 = scmp.ne.s32.totalorder %s131, %s145
      %p147 = scmp.eq.s32.totalorder %s22, 0
      %p148 = por %p146, %p147
      %s150 = sadd.s32 %s149, 1
      %p153 = scmp.eq.s32.totalorder %s16, 1
      %p154 = scmp.ne.s32.totalorder %s149, %s151
      %p155 = scmp.eq.s32.totalorder %s16, 0
      %p156 = por %p154, %p155
      %p157 = scmp.ne.s32.totalorder %s149, %s151
      %p158 = scmp.eq.s32.totalorder %s21, 1
      %p159 = por %p157, %p158
      %p160 = scmp.ne.s32.totalorder %s151, %s152
      %p161 = scmp.eq.s32.totalorder %s21, 0
      %p162 = por %p160, %p161
      %p163 = scmp.ne.s32.totalorder %s151, %s152
      %p164 = scmp.eq.s32.totalorder %s22, 1
      %p165 = por %p163, %p164
      %p167 = scmp.ne.s32.totalorder %s152, %s166
      %p168 = scmp.eq.s32.totalorder %s22, 0
      %p169 = por %p167, %p168
      %s171 = sadd.s32 %s170, 1
      %p174 = scmp.eq.s32.totalorder %s16, 1
      %p175 = scmp.ne.s32.totalorder %s170, %s172
      %p176 = scmp.eq.s32.totalorder %s16, 0
      %p177 = por %p175, %p176
      %p178 = scmp.ne.s32.totalorder %s170, %s172
      %p179 = scmp.eq.s32.totalorder %s21, 1
      %p180 = por %p178, %p179
      %p181 = scmp.ne.s32.totalorder %s172, %s173
      %p182 = scmp.eq.s32.totalorder %s21, 0
      %p183 = por %p181, %p182
      %p184 = scmp.ne.s32.totalorder %s172, %s173
      %p185 = scmp.eq.s32.totalorder %s22, 1
      %p186 = por %p184, %p185
      %p188 = scmp.ne.s32.totalorder %s173, %s187
      %p189 = scmp.eq.s32.totalorder %s22, 0
      %p190 = por %p188, %p189
      %s191 = ssub.s32 %s16, %s23
      %p192 = scmp.eq.s32.totalorder %s191, 0
      %s194 = sadd.s32 %s193, 1
      %s195 = scalar_select %p192, %s193, %s194
      %p198 = pneg %p192
      %p199 = scmp.eq.s32.totalorder %s16, 1
      %p200 = por %p198, %p199
      %p201 = scmp.ne.s32.totalorder %s193, %s196
      %p202 = scmp.eq.s32.totalorder %s16, 0
      %p203 = por %p201, %p202
      %p204 = scmp.ne.s32.totalorder %s193, %s196
      %p205 = scmp.eq.s32.totalorder %s21, 1
      %p206 = por %p204, %p205
      %p207 = scmp.ne.s32.totalorder %s196, %s197
      %p208 = scmp.eq.s32.totalorder %s21, 0
      %p209 = por %p207, %p208
      %p210 = scmp.ne.s32.totalorder %s196, %s197
      %p211 = scmp.eq.s32.totalorder %s22, 1
      %p212 = por %p210, %p211
      %p214 = scmp.ne.s32.totalorder %s197, %s213
      %p215 = scmp.eq.s32.totalorder %s22, 0
      %p216 = por %p214, %p215
      %p217 = scmp.le.s32.totalorder 1, %s16
      %p218 = scmp.lt.s32.totalorder %s16, 3
      %p219 = pnand %p217, %p218
      %p220 = pneg %p219
      // Predicated region
      $region9: #{attention_forward.3} parent=5 // pred_check
        _
      $region10: #{attention_forward.3} parent=5 // pred_check_branch
        %222 = sbr.rel (%p219) target = $region12
      $region11: #{attention_forward.3} parent=5 // pred_region
        %s223 = ssub.s32 %s16, 1
        // Predicated region
        $region13: #{attention_forward.3} parent=11 // pred_check
          %p224 = pneg %p141
        $region14: #{attention_forward.3} parent=11 // pred_check_branch
          %226 = sbr.rel (%p224) target = $region16
        $region15: #{attention_forward.3} parent=11 // pred_region
          _
        $region16: #{attention_forward.3} parent=11 // pred_fallthru
          _
        // Predicated region
        $region17: #{attention_forward.3} parent=11 // pred_check
          %p227 = pneg %p162
        $region18: #{attention_forward.3} parent=11 // pred_check_branch
          %229 = sbr.rel (%p227) target = $region20
        $region19: #{attention_forward.3} parent=11 // pred_region
          _
        $region20: #{attention_forward.3} parent=11 // pred_fallthru
          _
        // Predicated region
        $region21: #{attention_forward.3} parent=11 // pred_check
          %p230 = pneg %p183
        $region22: #{attention_forward.3} parent=11 // pred_check_branch
          %232 = sbr.rel (%p230) target = $region24
        $region23: #{attention_forward.3} parent=11 // pred_region
          _
        $region24: #{attention_forward.3} parent=11 // pred_fallthru
          _
      $region12: #{attention_forward.3} parent=5 // pred_fallthru
        _
      %p233 = scmp.lt.s32.totalorder %s16, 2
      // Predicated region
      $region25: #{attention_forward.3} parent=5 // pred_check
        %p234 = pneg %p233
      $region26: #{attention_forward.3} parent=5 // pred_check_branch
        %236 = sbr.rel (%p234) target = $region28
      $region27: #{attention_forward.3} parent=5 // pred_region
        // Predicated region
        $region29: #{attention_forward.3} parent=27 // pred_check
          %p237 = pneg %p36
        $region30: #{attention_forward.3} parent=27 // pred_check_branch
          %239 = sbr.rel (%p237) target = $region32
        $region31: #{attention_forward.3} parent=27 // pred_region
          %p240 = scmp.lt.s32.totalorder %s16, 1
          %s241 = scalar_select %p240, %s16, 1
          %s242 = smul.addr %s241, 4
          %s243 = smul.addr %s242, 8
          %s244 = scalar_lea.vmem %s0, %s243
        $region32: #{attention_forward.3} parent=27 // pred_fallthru
          _
        // Predicated region
        $region33: #{attention_forward.3} parent=27 // pred_check
          %p245 = pneg %p62
        $region34: #{attention_forward.3} parent=27 // pred_check_branch
          %247 = sbr.rel (%p245) target = $region36
        $region35: #{attention_forward.3} parent=27 // pred_region
          %p248 = scmp.lt.s32.totalorder %s16, 1
          %s249 = scalar_select %p248, %s16, 1
          %s250 = smul.addr %s249, 4
          %s251 = smul.addr %s250, 8
          %s252 = scalar_lea.vmem %s1, %s251
        $region36: #{attention_forward.3} parent=27 // pred_fallthru
          _
        // Predicated region
        $region37: #{attention_forward.3} parent=27 // pred_check
          %p253 = pneg %p88
        $region38: #{attention_forward.3} parent=27 // pred_check_branch
          %255 = sbr.rel (%p253) target = $region40
        $region39: #{attention_forward.3} parent=27 // pred_region
          %p256 = scmp.lt.s32.totalorder %s16, 1
          %s257 = scalar_select %p256, %s16, 1
          %s258 = smul.addr %s257, 4
          %s259 = smul.addr %s258, 8
          %s260 = scalar_lea.vmem %s2, %s259
        $region40: #{attention_forward.3} parent=27 // pred_fallthru
          _
        // Predicated region
        $region41: #{attention_forward.3} parent=27 // pred_check
          %p261 = pneg %p114
        $region42: #{attention_forward.3} parent=27 // pred_check_branch
          %263 = sbr.rel (%p261) target = $region44
        $region43: #{attention_forward.3} parent=27 // pred_region
          %p264 = scmp.lt.s32.totalorder %s16, 1
          %s265 = scalar_select %p264, %s16, 1
          %s266 = smul.addr %s265, 8
          %s267 = scalar_lea.vmem %s3, %s266
        $region44: #{attention_forward.3} parent=27 // pred_fallthru
          _
      $region28: #{attention_forward.3} parent=5 // pred_fallthru
        _
      %p268 = scmp.le.s32.totalorder 1, %s16
      %p269 = scmp.lt.s32.totalorder %s16, 3
      %p270 = pnand %p268, %p269
      %p271 = pneg %p270
      // Predicated region
      $region45: #{attention_forward.3} parent=5 // pred_check
        _
      $region46: #{attention_forward.3} parent=5 // pred_check_branch
        %273 = sbr.rel (%p270) target = $region48
      $region47: #{attention_forward.3} parent=5 // pred_region
        %s274 = ssub.s32 %s16, 1
        %p275 = scmp.lt.s32.totalorder %s21, 1
        %s276 = scalar_select %p275, %s21, 1
        %s277 = smul.addr %s276, 4
        %s278 = smul.addr %s277, 8
        %s279 = scalar_lea.vmem %s0, %s278
        %p280 = pneg %p42
        %p281 = pneg %p39
        %p282 = scmp.lt.s32.totalorder %s21, 1
        %s283 = scalar_select %p282, %s21, 1
        %s284 = smul.addr %s283, 4
        %s285 = smul.addr %s284, 8
        %s286 = scalar_lea.vmem %s1, %s285
        %p287 = pneg %p68
        %p288 = pneg %p65
        %p289 = scmp.lt.s32.totalorder %s21, 1
        %s290 = scalar_select %p289, %s21, 1
        %s291 = smul.addr %s290, 4
        %s292 = smul.addr %s291, 8
        %s293 = scalar_lea.vmem %s2, %s292
        %p294 = pneg %p94
        %p295 = pneg %p91
        %p296 = scmp.lt.s32.totalorder %s21, 1
        %s297 = scalar_select %p296, %s21, 1
        %s298 = smul.addr %s297, 8
        %s299 = scalar_lea.vmem %s3, %s298
        %p300 = pneg %p120
        %p301 = pneg %p117
        %p302 = pneg %p141
        %p303 = pneg %p138
        %p304 = pneg %p162
        %p305 = pneg %p159
        %p306 = pneg %p183
        %p307 = pneg %p180
        %p308 = pneg %p209
        %p309 = pneg %p206
        %s310 = sand.u32 %s196, 1
        %s311 = scalar_lea.sflag [#allocation3], %s310
        %s312 = sand.u32 %s196, 1
        %s313 = smul.addr %s312, 8
        %s314 = scalar_lea.vmem [#allocation2], %s313
        %p315 = scmp.lt.s32.totalorder %s21, 1
        %s316 = scalar_select %p315, %s21, 1
        %s317 = smul.addr %s316, 4
        %s318 = smul.addr %s317, 8
        %s319 = scalar_lea.vmem %s0, %s318
        %p320 = scmp.lt.s32.totalorder %s21, 1
        %s321 = scalar_select %p320, %s21, 1
        %s322 = smul.addr %s321, 4
        %s323 = smul.addr %s322, 8
        %s324 = scalar_lea.vmem %s1, %s323
        %p325 = scmp.lt.s32.totalorder %s21, 1
        %s326 = scalar_select %p325, %s21, 1
        %s327 = smul.addr %s326, 4
        %s328 = smul.addr %s327, 8
        %s329 = scalar_lea.vmem %s2, %s328
        %p330 = scmp.lt.s32.totalorder %s21, 1
        %s331 = scalar_select %p330, %s21, 1
        %s332 = smul.addr %s331, 8
        %s333 = scalar_lea.vmem %s3, %s332
        %v335 = vld [vmem:[%s319] sm:$0xff]
        %v336 = vld [vmem:[%s319 + $0x8] sm:$0xff]
        %v337 = vld [vmem:[%s319 + $0x10] sm:$0xff]
        %v338 = vld [vmem:[%s319 + $0x18] sm:$0xff]
        %v339 = vld [vmem:[%s324] sm:$0xff]
        %v340 = vld [vmem:[%s324 + $0x8] sm:$0xff]
        %v341 = vld [vmem:[%s324 + $0x10] sm:$0xff]
        %v342 = vld [vmem:[%s324 + $0x18] sm:$0xff]
        %v343 = vld [vmem:[%s329] sm:$0xff]
        %v344 = vld [vmem:[%s329 + $0x8] sm:$0xff]
        %v345 = vld [vmem:[%s329 + $0x10] sm:$0xff]
        %v346 = vld [vmem:[%s329 + $0x18] sm:$0xff]
        %vm347 = vcmask 64512
        %v349 = vsel %vm347, %v335, 0
        %v352 = vsel %vm347, %v339, 0
        %354 = vmatprep.subr.mxu0 0.0
        %355 = vmatpush1.xpose.msra.mxu0 0.0
        %356 = vmatprep.subr.mxu0 0.0
        %357 = vmatpush1.xpose.msra.mxu0 0.0
        %358 = vmatprep.subr.mxu0 0.0
        %359 = vmatpush1.xpose.msra.mxu0 0.0
        %360 = vmatprep.subr.mxu0 0.0
        %361 = vmatpush1.xpose.msra.mxu0 0.0
        %362 = vmatprep.subr.mxu0 0.0
        %363 = vmatpush1.xpose.msra.mxu0 0.0
        %364 = vmatprep.subr.mxu0 0.0
        %365 = vmatpush1.xpose.msra.mxu0 0.0
        %366 = vmatprep.subr.mxu0 0.0
        %367 = vmatpush1.xpose.msra.mxu0 0.0
        %368 = vmatprep.subr.mxu0 0.0
        %369 = vmatpush1.xpose.msra.mxu0 0.0
        %370 = vmatprep.subr.mxu0 0.0
        %371 = vmatpush1.xpose.msra.mxu0 0.0
        %372 = vmatprep.subr.mxu0 0.0
        %373 = vmatpush1.xpose.msra.mxu0 0.0
        %374 = vmatprep.subr.mxu0 0.0
        %375 = vmatpush1.xpose.msra.mxu0 0.0
        %376 = vmatprep.subr.mxu0 0.0
        %377 = vmatpush1.xpose.msra.mxu0 0.0
        %378 = vmatprep.subr.mxu0 0.0
        %379 = vmatpush1.xpose.msra.mxu0 0.0
        %380 = vmatprep.subr.mxu0 0.0
        %381 = vmatpush1.xpose.msra.mxu0 0.0
        %382 = vmatprep.subr.mxu0 0.0
        %383 = vmatpush1.xpose.msra.mxu0 0.0
        %384 = vmatprep.subr.mxu0 0.0
        %385 = vmatpush1.xpose.msra.mxu0 %v352
        %386 = vmatprep.subr.mxu0 0.0
        %387 = vmatpush2.xpose.msra.mxu0 0.0
        %388 = vmatprep.subr.mxu0 0.0
        %389 = vmatpush2.xpose.msra.mxu0 0.0
        %390 = vmatprep.subr.mxu0 0.0
        %391 = vmatpush2.xpose.msra.mxu0 0.0
        %392 = vmatprep.subr.mxu0 0.0
        %393 = vmatpush2.xpose.msra.mxu0 0.0
        %394 = vmatprep.subr.mxu0 0.0
        %395 = vmatpush2.xpose.msra.mxu0 0.0
        %396 = vmatprep.subr.mxu0 0.0
        %397 = vmatpush2.xpose.msra.mxu0 0.0
        %398 = vmatprep.subr.mxu0 0.0
        %399 = vmatpush2.xpose.msra.mxu0 0.0
        %400 = vmatprep.subr.mxu0 0.0
        %401 = vmatpush2.xpose.msra.mxu0 0.0
        %402 = vmatprep.subr.mxu0 0.0
        %403 = vmatpush2.xpose.msra.mxu0 0.0
        %404 = vmatprep.subr.mxu0 0.0
        %405 = vmatpush2.xpose.msra.mxu0 0.0
        %406 = vmatprep.subr.mxu0 0.0
        %407 = vmatpush2.xpose.msra.mxu0 0.0
        %408 = vmatprep.subr.mxu0 0.0
        %409 = vmatpush2.xpose.msra.mxu0 0.0
        %410 = vmatprep.subr.mxu0 0.0
        %411 = vmatpush2.xpose.msra.mxu0 0.0
        %412 = vmatprep.subr.mxu0 0.0
        %413 = vmatpush2.xpose.msra.mxu0 0.0
        %414 = vmatprep.subr.mxu0 0.0
        %415 = vmatpush2.xpose.msra.mxu0 0.0
        %416 = vmatprep.subr.mxu0 0.0
        %417 = vmatpush2.xpose.msra.mxu0 0.0
        %418 = vmatprep.mubr.f32.mxu0 0.0
        %419 = vmatmul.mubr.f32.gmra.mxu0 %v349
        %v420 = vpop.f32.mrf.mxu0
        %v421 = vadd.f32 0.0, %v420
        %v422 = vpop.f32.mrf.mxu0
        %423 = vdwg.mxu0
        %v425 = vsel %vm347, %v336, 0
        %v428 = vsel %vm347, %v340, 0
        %430 = vmatprep.subr.mxu0 0.0
        %431 = vmatpush1.xpose.msra.mxu0 0.0
        %432 = vmatprep.subr.mxu0 0.0
        %433 = vmatpush1.xpose.msra.mxu0 0.0
        %434 = vmatprep.subr.mxu0 0.0
        %435 = vmatpush1.xpose.msra.mxu0 0.0
        %436 = vmatprep.subr.mxu0 0.0
        %437 = vmatpush1.xpose.msra.mxu0 0.0
        %438 = vmatprep.subr.mxu0 0.0
        %439 = vmatpush1.xpose.msra.mxu0 0.0
        %440 = vmatprep.subr.mxu0 0.0
        %441 = vmatpush1.xpose.msra.mxu0 0.0
        %442 = vmatprep.subr.mxu0 0.0
        %443 = vmatpush1.xpose.msra.mxu0 0.0
        %444 = vmatprep.subr.mxu0 0.0
        %445 = vmatpush1.xpose.msra.mxu0 0.0
        %446 = vmatprep.subr.mxu0 0.0
        %447 = vmatpush1.xpose.msra.mxu0 0.0
        %448 = vmatprep.subr.mxu0 0.0
        %449 = vmatpush1.xpose.msra.mxu0 0.0
        %450 = vmatprep.subr.mxu0 0.0
        %451 = vmatpush1.xpose.msra.mxu0 0.0
        %452 = vmatprep.subr.mxu0 0.0
        %453 = vmatpush1.xpose.msra.mxu0 0.0
        %454 = vmatprep.subr.mxu0 0.0
        %455 = vmatpush1.xpose.msra.mxu0 0.0
        %456 = vmatprep.subr.mxu0 0.0
        %457 = vmatpush1.xpose.msra.mxu0 0.0
        %458 = vmatprep.subr.mxu0 0.0
        %459 = vmatpush1.xpose.msra.mxu0 0.0
        %460 = vmatprep.subr.mxu0 0.0
        %461 = vmatpush1.xpose.msra.mxu0 %v428
        %462 = vmatprep.subr.mxu0 0.0
        %463 = vmatpush2.xpose.msra.mxu0 0.0
        %464 = vmatprep.subr.mxu0 0.0
        %465 = vmatpush2.xpose.msra.mxu0 0.0
        %466 = vmatprep.subr.mxu0 0.0
        %467 = vmatpush2.xpose.msra.mxu0 0.0
        %468 = vmatprep.subr.mxu0 0.0
        %469 = vmatpush2.xpose.msra.mxu0 0.0
        %470 = vmatprep.subr.mxu0 0.0
        %471 = vmatpush2.xpose.msra.mxu0 0.0
        %472 = vmatprep.subr.mxu0 0.0
        %473 = vmatpush2.xpose.msra.mxu0 0.0
        %474 = vmatprep.subr.mxu0 0.0
        %475 = vmatpush2.xpose.msra.mxu0 0.0
        %476 = vmatprep.subr.mxu0 0.0
        %477 = vmatpush2.xpose.msra.mxu0 0.0
        %478 = vmatprep.subr.mxu0 0.0
        %479 = vmatpush2.xpose.msra.mxu0 0.0
        %480 = vmatprep.subr.mxu0 0.0
        %481 = vmatpush2.xpose.msra.mxu0 0.0
        %482 = vmatprep.subr.mxu0 0.0
        %483 = vmatpush2.xpose.msra.mxu0 0.0
        %484 = vmatprep.subr.mxu0 0.0
        %485 = vmatpush2.xpose.msra.mxu0 0.0
        %486 = vmatprep.subr.mxu0 0.0
        %487 = vmatpush2.xpose.msra.mxu0 0.0
        %488 = vmatprep.subr.mxu0 0.0
        %489 = vmatpush2.xpose.msra.mxu0 0.0
        %490 = vmatprep.subr.mxu0 0.0
        %491 = vmatpush2.xpose.msra.mxu0 0.0
        %492 = vmatprep.subr.mxu0 0.0
        %493 = vmatpush2.xpose.msra.mxu0 0.0
        %494 = vmatprep.mubr.f32.mxu0 0.0
        %495 = vmatmul.mubr.f32.gmra.mxu0 %v425
        %v496 = vpop.f32.mrf.mxu0
        %v497 = vadd.f32 0.0, %v496
        %v498 = vpop.f32.mrf.mxu0
        %499 = vdwg.mxu0
        %v501 = vsel %vm347, %v337, 0
        %v504 = vsel %vm347, %v341, 0
        %506 = vmatprep.subr.mxu0 0.0
        %507 = vmatpush1.xpose.msra.mxu0 0.0
        %508 = vmatprep.subr.mxu0 0.0
        %509 = vmatpush1.xpose.msra.mxu0 0.0
        %510 = vmatprep.subr.mxu0 0.0
        %511 = vmatpush1.xpose.msra.mxu0 0.0
        %512 = vmatprep.subr.mxu0 0.0
        %513 = vmatpush1.xpose.msra.mxu0 0.0
        %514 = vmatprep.subr.mxu0 0.0
        %515 = vmatpush1.xpose.msra.mxu0 0.0
        %516 = vmatprep.subr.mxu0 0.0
        %517 = vmatpush1.xpose.msra.mxu0 0.0
        %518 = vmatprep.subr.mxu0 0.0
        %519 = vmatpush1.xpose.msra.mxu0 0.0
        %520 = vmatprep.subr.mxu0 0.0
        %521 = vmatpush1.xpose.msra.mxu0 0.0
        %522 = vmatprep.subr.mxu0 0.0
        %523 = vmatpush1.xpose.msra.mxu0 0.0
        %524 = vmatprep.subr.mxu0 0.0
        %525 = vmatpush1.xpose.msra.mxu0 0.0
        %526 = vmatprep.subr.mxu0 0.0
        %527 = vmatpush1.xpose.msra.mxu0 0.0
        %528 = vmatprep.subr.mxu0 0.0
        %529 = vmatpush1.xpose.msra.mxu0 0.0
        %530 = vmatprep.subr.mxu0 0.0
        %531 = vmatpush1.xpose.msra.mxu0 0.0
        %532 = vmatprep.subr.mxu0 0.0
        %533 = vmatpush1.xpose.msra.mxu0 0.0
        %534 = vmatprep.subr.mxu0 0.0
        %535 = vmatpush1.xpose.msra.mxu0 0.0
        %536 = vmatprep.subr.mxu0 0.0
        %537 = vmatpush1.xpose.msra.mxu0 %v504
        %538 = vmatprep.subr.mxu0 0.0
        %539 = vmatpush2.xpose.msra.mxu0 0.0
        %540 = vmatprep.subr.mxu0 0.0
        %541 = vmatpush2.xpose.msra.mxu0 0.0
        %542 = vmatprep.subr.mxu0 0.0
        %543 = vmatpush2.xpose.msra.mxu0 0.0
        %544 = vmatprep.subr.mxu0 0.0
        %545 = vmatpush2.xpose.msra.mxu0 0.0
        %546 = vmatprep.subr.mxu0 0.0
        %547 = vmatpush2.xpose.msra.mxu0 0.0
        %548 = vmatprep.subr.mxu0 0.0
        %549 = vmatpush2.xpose.msra.mxu0 0.0
        %550 = vmatprep.subr.mxu0 0.0
        %551 = vmatpush2.xpose.msra.mxu0 0.0
        %552 = vmatprep.subr.mxu0 0.0
        %553 = vmatpush2.xpose.msra.mxu0 0.0
        %554 = vmatprep.subr.mxu0 0.0
        %555 = vmatpush2.xpose.msra.mxu0 0.0
        %556 = vmatprep.subr.mxu0 0.0
        %557 = vmatpush2.xpose.msra.mxu0 0.0
        %558 = vmatprep.subr.mxu0 0.0
        %559 = vmatpush2.xpose.msra.mxu0 0.0
        %560 = vmatprep.subr.mxu0 0.0
        %561 = vmatpush2.xpose.msra.mxu0 0.0
        %562 = vmatprep.subr.mxu0 0.0
        %563 = vmatpush2.xpose.msra.mxu0 0.0
        %564 = vmatprep.subr.mxu0 0.0
        %565 = vmatpush2.xpose.msra.mxu0 0.0
        %566 = vmatprep.subr.mxu0 0.0
        %567 = vmatpush2.xpose.msra.mxu0 0.0
        %568 = vmatprep.subr.mxu0 0.0
        %569 = vmatpush2.xpose.msra.mxu0 0.0
        %570 = vmatprep.mubr.f32.mxu0 0.0
        %571 = vmatmul.mubr.f32.gmra.mxu0 %v501
        %v572 = vpop.f32.mrf.mxu0
        %v573 = vadd.f32 0.0, %v572
        %v574 = vpop.f32.mrf.mxu0
        %575 = vdwg.mxu0
        %v577 = vsel %vm347, %v338, 0
        %v580 = vsel %vm347, %v342, 0
        %582 = vmatprep.subr.mxu0 0.0
        %583 = vmatpush1.xpose.msra.mxu0 0.0
        %584 = vmatprep.subr.mxu0 0.0
        %585 = vmatpush1.xpose.msra.mxu0 0.0
        %586 = vmatprep.subr.mxu0 0.0
        %587 = vmatpush1.xpose.msra.mxu0 0.0
        %588 = vmatprep.subr.mxu0 0.0
        %589 = vmatpush1.xpose.msra.mxu0 0.0
        %590 = vmatprep.subr.mxu0 0.0
        %591 = vmatpush1.xpose.msra.mxu0 0.0
        %592 = vmatprep.subr.mxu0 0.0
        %593 = vmatpush1.xpose.msra.mxu0 0.0
        %594 = vmatprep.subr.mxu0 0.0
        %595 = vmatpush1.xpose.msra.mxu0 0.0
        %596 = vmatprep.subr.mxu0 0.0
        %597 = vmatpush1.xpose.msra.mxu0 0.0
        %598 = vmatprep.subr.mxu0 0.0
        %599 = vmatpush1.xpose.msra.mxu0 0.0
        %600 = vmatprep.subr.mxu0 0.0
        %601 = vmatpush1.xpose.msra.mxu0 0.0
        %602 = vmatprep.subr.mxu0 0.0
        %603 = vmatpush1.xpose.msra.mxu0 0.0
        %604 = vmatprep.subr.mxu0 0.0
        %605 = vmatpush1.xpose.msra.mxu0 0.0
        %606 = vmatprep.subr.mxu0 0.0
        %607 = vmatpush1.xpose.msra.mxu0 0.0
        %608 = vmatprep.subr.mxu0 0.0
        %609 = vmatpush1.xpose.msra.mxu0 0.0
        %610 = vmatprep.subr.mxu0 0.0
        %611 = vmatpush1.xpose.msra.mxu0 0.0
        %612 = vmatprep.subr.mxu0 0.0
        %613 = vmatpush1.xpose.msra.mxu0 %v580
        %614 = vmatprep.subr.mxu0 0.0
        %615 = vmatpush2.xpose.msra.mxu0 0.0
        %616 = vmatprep.subr.mxu0 0.0
        %617 = vmatpush2.xpose.msra.mxu0 0.0
        %618 = vmatprep.subr.mxu0 0.0
        %619 = vmatpush2.xpose.msra.mxu0 0.0
        %620 = vmatprep.subr.mxu0 0.0
        %621 = vmatpush2.xpose.msra.mxu0 0.0
        %622 = vmatprep.subr.mxu0 0.0
        %623 = vmatpush2.xpose.msra.mxu0 0.0
        %624 = vmatprep.subr.mxu0 0.0
        %625 = vmatpush2.xpose.msra.mxu0 0.0
        %626 = vmatprep.subr.mxu0 0.0
        %627 = vmatpush2.xpose.msra.mxu0 0.0
        %628 = vmatprep.subr.mxu0 0.0
        %629 = vmatpush2.xpose.msra.mxu0 0.0
        %630 = vmatprep.subr.mxu0 0.0
        %631 = vmatpush2.xpose.msra.mxu0 0.0
        %632 = vmatprep.subr.mxu0 0.0
        %633 = vmatpush2.xpose.msra.mxu0 0.0
        %634 = vmatprep.subr.mxu0 0.0
        %635 = vmatpush2.xpose.msra.mxu0 0.0
        %636 = vmatprep.subr.mxu0 0.0
        %637 = vmatpush2.xpose.msra.mxu0 0.0
        %638 = vmatprep.subr.mxu0 0.0
        %639 = vmatpush2.xpose.msra.mxu0 0.0
        %640 = vmatprep.subr.mxu0 0.0
        %641 = vmatpush2.xpose.msra.mxu0 0.0
        %642 = vmatprep.subr.mxu0 0.0
        %643 = vmatpush2.xpose.msra.mxu0 0.0
        %644 = vmatprep.subr.mxu0 0.0
        %645 = vmatpush2.xpose.msra.mxu0 0.0
        %646 = vmatprep.mubr.f32.mxu0 0.0
        %647 = vmatmul.mubr.f32.gmra.mxu0 %v577
        %v648 = vpop.f32.mrf.mxu0
        %v649 = vadd.f32 0.0, %v648
        %v650 = vpop.f32.mrf.mxu0
        %651 = vdwg.mxu0
        %v652 = vmul.f32 %v421, 0.35355338
        %v653 = vmul.f32 %v497, 0.35355338
        %v654 = vmul.f32 %v573, 0.35355338
        %v655 = vmul.f32 %v649, 0.35355338
        %v656 = vsel %vm347, %v652, -inf
        %657 = vmax.xlane.f32.xlu0 %v656
        %v658 = vpop.xlane.xlu0 %657
        %v659 = vsel %vm347, %v653, -inf
        %660 = vmax.xlane.f32.xlu0 %v659
        %v661 = vpop.xlane.xlu0 %660
        %v662 = vsel %vm347, %v654, -inf
        %663 = vmax.xlane.f32.xlu0 %v662
        %v664 = vpop.xlane.xlu0 %663
        %v665 = vsel %vm347, %v655, -inf
        %666 = vmax.xlane.f32.xlu0 %v665
        %v667 = vpop.xlane.xlu0 %666
        %v668 = vsub.f32 %v652, %v658
        %v669 = vsub.f32 %v653, %v661
        %v670 = vsub.f32 %v654, %v664
        %v671 = vsub.f32 %v655, %v667
        %v672 = vmul.f32 %v668, 1.442695
        %v673 = vpow.pop %v672
        %v674 = vmul.f32 %v669, 1.442695
        %v675 = vpow.pop %v674
        %v676 = vmul.f32 %v670, 1.442695
        %v677 = vpow.pop %v676
        %v678 = vmul.f32 %v671, 1.442695
        %v679 = vpow.pop %v678
        %v680 = vsel %vm347, %v673, 0.0
        %681 = vadd.xlane.f32.xlu0 %v680
        %v682 = vpop.xlane.xlu0 %681
        %v683 = vsel %vm347, %v675, 0.0
        %684 = vadd.xlane.f32.xlu0 %v683
        %v685 = vpop.xlane.xlu0 %684
        %v686 = vsel %vm347, %v677, 0.0
        %687 = vadd.xlane.f32.xlu0 %v686
        %v688 = vpop.xlane.xlu0 %687
        %v689 = vsel %vm347, %v679, 0.0
        %690 = vadd.xlane.f32.xlu0 %v689
        %v691 = vpop.xlane.xlu0 %690
        %v692 = vrcp.pop %v682
        %v693 = vrcp.pop %v685
        %v694 = vrcp.pop %v688
        %v695 = vrcp.pop %v691
        %v696 = vmul.f32 %v673, %v692
        %v697 = vmul.f32 %v675, %v693
        %v698 = vmul.f32 %v677, %v694
        %v699 = vmul.f32 %v679, %v695
        %v700 = vpack.c.bf16 %v696, %v696
        %v701 = vpack.c.bf16 %v697, %v697
        %v702 = vpack.c.bf16 %v698, %v698
        %v703 = vpack.c.bf16 %v699, %v699
        %v704 = vpack.c.bf16 %v343, %v343
        %v705 = vpack.c.bf16 %v344, %v344
        %v706 = vpack.c.bf16 %v345, %v345
        %v707 = vpack.c.bf16 %v346, %v346
        %v709 = vsel %vm347, %v700, 0
        %vm711 = vcmask 1043456
        %v713 = vsel %vm711, %v704, 0
        %715 = vmatprep.subr.bf16.mxu0 0
        %716 = vmatpush1.bf16.msra.mxu0 0
        %717 = vmatprep.subr.bf16.mxu0 0
        %718 = vmatpush1.bf16.msra.mxu0 0
        %719 = vmatprep.subr.bf16.mxu0 0
        %720 = vmatpush1.bf16.msra.mxu0 0
        %721 = vmatprep.subr.bf16.mxu0 0
        %722 = vmatpush1.bf16.msra.mxu0 0
        %723 = vmatprep.subr.bf16.mxu0 0
        %724 = vmatpush1.bf16.msra.mxu0 0
        %725 = vmatprep.subr.bf16.mxu0 0
        %726 = vmatpush1.bf16.msra.mxu0 0
        %727 = vmatprep.subr.bf16.mxu0 0
        %728 = vmatpush1.bf16.msra.mxu0 0
        %729 = vmatprep.subr.bf16.mxu0 0
        %730 = vmatpush1.bf16.msra.mxu0 %v713
        %731 = vmatprep.subr.bf16.mxu0 0
        %732 = vmatpush2.bf16.msra.mxu0 0
        %733 = vmatprep.subr.bf16.mxu0 0
        %734 = vmatpush2.bf16.msra.mxu0 0
        %735 = vmatprep.subr.bf16.mxu0 0
        %736 = vmatpush2.bf16.msra.mxu0 0
        %737 = vmatprep.subr.bf16.mxu0 0
        %738 = vmatpush2.bf16.msra.mxu0 0
        %739 = vmatprep.subr.bf16.mxu0 0
        %740 = vmatpush2.bf16.msra.mxu0 0
        %741 = vmatprep.subr.bf16.mxu0 0
        %742 = vmatpush2.bf16.msra.mxu0 0
        %743 = vmatprep.subr.bf16.mxu0 0
        %744 = vmatpush2.bf16.msra.mxu0 0
        %745 = vmatprep.subr.bf16.mxu0 0
        %746 = vmatpush2.bf16.msra.mxu0 0
        %747 = vmatprep.mubr.bf16.mxu0 0
        %748 = vmatmul.mubr.bf16.gmra.mxu0 %v709
        %v749 = vpop.f32.mrf.mxu0
        %v750 = vadd.f32 0.0, %v749
        %v751 = vpop.f32.mrf.mxu0
        %v752 = vpop.f32.mrf.mxu0
        %v753 = vpop.f32.mrf.mxu0
        %754 = vdwg.mxu0
        %v756 = vsel %vm347, %v701, 0
        %v759 = vsel %vm711, %v705, 0
        %761 = vmatprep.subr.bf16.mxu0 0
        %762 = vmatpush1.bf16.msra.mxu0 0
        %763 = vmatprep.subr.bf16.mxu0 0
        %764 = vmatpush1.bf16.msra.mxu0 0
        %765 = vmatprep.subr.bf16.mxu0 0
        %766 = vmatpush1.bf16.msra.mxu0 0
        %767 = vmatprep.subr.bf16.mxu0 0
        %768 = vmatpush1.bf16.msra.mxu0 0
        %769 = vmatprep.subr.bf16.mxu0 0
        %770 = vmatpush1.bf16.msra.mxu0 0
        %771 = vmatprep.subr.bf16.mxu0 0
        %772 = vmatpush1.bf16.msra.mxu0 0
        %773 = vmatprep.subr.bf16.mxu0 0
        %774 = vmatpush1.bf16.msra.mxu0 0
        %775 = vmatprep.subr.bf16.mxu0 0
        %776 = vmatpush1.bf16.msra.mxu0 %v759
        %777 = vmatprep.subr.bf16.mxu0 0
        %778 = vmatpush2.bf16.msra.mxu0 0
        %779 = vmatprep.subr.bf16.mxu0 0
        %780 = vmatpush2.bf16.msra.mxu0 0
        %781 = vmatprep.subr.bf16.mxu0 0
        %782 = vmatpush2.bf16.msra.mxu0 0
        %783 = vmatprep.subr.bf16.mxu0 0
        %784 = vmatpush2.bf16.msra.mxu0 0
        %785 = vmatprep.subr.bf16.mxu0 0
        %786 = vmatpush2.bf16.msra.mxu0 0
        %787 = vmatprep.subr.bf16.mxu0 0
        %788 = vmatpush2.bf16.msra.mxu0 0
        %789 = vmatprep.subr.bf16.mxu0 0
        %790 = vmatpush2.bf16.msra.mxu0 0
        %791 = vmatprep.subr.bf16.mxu0 0
        %792 = vmatpush2.bf16.msra.mxu0 0
        %793 = vmatprep.mubr.bf16.mxu0 0
        %794 = vmatmul.mubr.bf16.gmra.mxu0 %v756
        %v795 = vpop.f32.mrf.mxu0
        %v796 = vadd.f32 0.0, %v795
        %v797 = vpop.f32.mrf.mxu0
        %v798 = vpop.f32.mrf.mxu0
        %v799 = vpop.f32.mrf.mxu0
        %800 = vdwg.mxu0
        %v802 = vsel %vm347, %v702, 0
        %v805 = vsel %vm711, %v706, 0
        %807 = vmatprep.subr.bf16.mxu0 0
        %808 = vmatpush1.bf16.msra.mxu0 0
        %809 = vmatprep.subr.bf16.mxu0 0
        %810 = vmatpush1.bf16.msra.mxu0 0
        %811 = vmatprep.subr.bf16.mxu0 0
        %812 = vmatpush1.bf16.msra.mxu0 0
        %813 = vmatprep.subr.bf16.mxu0 0
        %814 = vmatpush1.bf16.msra.mxu0 0
        %815 = vmatprep.subr.bf16.mxu0 0
        %816 = vmatpush1.bf16.msra.mxu0 0
        %817 = vmatprep.subr.bf16.mxu0 0
        %818 = vmatpush1.bf16.msra.mxu0 0
        %819 = vmatprep.subr.bf16.mxu0 0
        %820 = vmatpush1.bf16.msra.mxu0 0
        %821 = vmatprep.subr.bf16.mxu0 0
        %822 = vmatpush1.bf16.msra.mxu0 %v805
        %823 = vmatprep.subr.bf16.mxu0 0
        %824 = vmatpush2.bf16.msra.mxu0 0
        %825 = vmatprep.subr.bf16.mxu0 0
        %826 = vmatpush2.bf16.msra.mxu0 0
        %827 = vmatprep.subr.bf16.mxu0 0
        %828 = vmatpush2.bf16.msra.mxu0 0
        %829 = vmatprep.subr.bf16.mxu0 0
        %830 = vmatpush2.bf16.msra.mxu0 0
        %831 = vmatprep.subr.bf16.mxu0 0
        %832 = vmatpush2.bf16.msra.mxu0 0
        %833 = vmatprep.subr.bf16.mxu0 0
        %834 = vmatpush2.bf16.msra.mxu0 0
        %835 = vmatprep.subr.bf16.mxu0 0
        %836 = vmatpush2.bf16.msra.mxu0 0
        %837 = vmatprep.subr.bf16.mxu0 0
        %838 = vmatpush2.bf16.msra.mxu0 0
        %839 = vmatprep.mubr.bf16.mxu0 0
        %840 = vmatmul.mubr.bf16.gmra.mxu0 %v802
        %v841 = vpop.f32.mrf.mxu0
        %v842 = vadd.f32 0.0, %v841
        %v843 = vpop.f32.mrf.mxu0
        %v844 = vpop.f32.mrf.mxu0
        %v845 = vpop.f32.mrf.mxu0
        %846 = vdwg.mxu0
        %v848 = vsel %vm347, %v703, 0
        %v851 = vsel %vm711, %v707, 0
        %853 = vmatprep.subr.bf16.mxu0 0
        %854 = vmatpush1.bf16.msra.mxu0 0
        %855 = vmatprep.subr.bf16.mxu0 0
        %856 = vmatpush1.bf16.msra.mxu0 0
        %857 = vmatprep.subr.bf16.mxu0 0
        %858 = vmatpush1.bf16.msra.mxu0 0
        %859 = vmatprep.subr.bf16.mxu0 0
        %860 = vmatpush1.bf16.msra.mxu0 0
        %861 = vmatprep.subr.bf16.mxu0 0
        %862 = vmatpush1.bf16.msra.mxu0 0
        %863 = vmatprep.subr.bf16.mxu0 0
        %864 = vmatpush1.bf16.msra.mxu0 0
        %865 = vmatprep.subr.bf16.mxu0 0
        %866 = vmatpush1.bf16.msra.mxu0 0
        %867 = vmatprep.subr.bf16.mxu0 0
        %868 = vmatpush1.bf16.msra.mxu0 %v851
        %869 = vmatprep.subr.bf16.mxu0 0
        %870 = vmatpush2.bf16.msra.mxu0 0
        %871 = vmatprep.subr.bf16.mxu0 0
        %872 = vmatpush2.bf16.msra.mxu0 0
        %873 = vmatprep.subr.bf16.mxu0 0
        %874 = vmatpush2.bf16.msra.mxu0 0
        %875 = vmatprep.subr.bf16.mxu0 0
        %876 = vmatpush2.bf16.msra.mxu0 0
        %877 = vmatprep.subr.bf16.mxu0 0
        %878 = vmatpush2.bf16.msra.mxu0 0
        %879 = vmatprep.subr.bf16.mxu0 0
        %880 = vmatpush2.bf16.msra.mxu0 0
        %881 = vmatprep.subr.bf16.mxu0 0
        %882 = vmatpush2.bf16.msra.mxu0 0
        %883 = vmatprep.subr.bf16.mxu0 0
        %884 = vmatpush2.bf16.msra.mxu0 0
        %885 = vmatprep.mubr.bf16.mxu0 0
        %886 = vmatmul.mubr.bf16.gmra.mxu0 %v848
        %v887 = vpop.f32.mrf.mxu0
        %v888 = vadd.f32 0.0, %v887
        %v889 = vpop.f32.mrf.mxu0
        %v890 = vpop.f32.mrf.mxu0
        %v891 = vpop.f32.mrf.mxu0
        %892 = vdwg.mxu0
        %v893 = vpack.c.bf16 %v750, %v750
        %v894 = vpack.c.bf16 %v796, %v796
        %v895 = vpack.c.bf16 %v842, %v842
        %v896 = vpack.c.bf16 %v888, %v888
        %v897 = vld [vmem:[%s4] sm:$0xf]
        %v898 = vld [vmem:[%s4 + $0x4] sm:$0xf]
        %v899 = vld [vmem:[%s4 + $0x8] sm:$0xf]
        %v900 = vld [vmem:[%s4 + $0xc] sm:$0xf]
        %v902 = vsel %vm347, %v893, 0
        %v905 = vsel %vm711, %v897, 0
        %907 = vmatprep.subr.bf16.mxu0 0
        %908 = vmatpush1.bf16.msra.mxu0 0
        %909 = vmatprep.subr.bf16.mxu0 0
        %910 = vmatpush1.bf16.msra.mxu0 0
        %911 = vmatprep.subr.bf16.mxu0 0
        %912 = vmatpush1.bf16.msra.mxu0 0
        %913 = vmatprep.subr.bf16.mxu0 0
        %914 = vmatpush1.bf16.msra.mxu0 0
        %915 = vmatprep.subr.bf16.mxu0 0
        %916 = vmatpush1.bf16.msra.mxu0 0
        %917 = vmatprep.subr.bf16.mxu0 0
        %918 = vmatpush1.bf16.msra.mxu0 0
        %919 = vmatprep.subr.bf16.mxu0 0
        %920 = vmatpush1.bf16.msra.mxu0 0
        %921 = vmatprep.subr.bf16.mxu0 0
        %922 = vmatpush1.bf16.msra.mxu0 %v905
        %923 = vmatprep.subr.bf16.mxu0 0
        %924 = vmatpush2.bf16.msra.mxu0 0
        %925 = vmatprep.subr.bf16.mxu0 0
        %926 = vmatpush2.bf16.msra.mxu0 0
        %927 = vmatprep.subr.bf16.mxu0 0
        %928 = vmatpush2.bf16.msra.mxu0 0
        %929 = vmatprep.subr.bf16.mxu0 0
        %930 = vmatpush2.bf16.msra.mxu0 0
        %931 = vmatprep.subr.bf16.mxu0 0
        %932 = vmatpush2.bf16.msra.mxu0 0
        %933 = vmatprep.subr.bf16.mxu0 0
        %934 = vmatpush2.bf16.msra.mxu0 0
        %935 = vmatprep.subr.bf16.mxu0 0
        %936 = vmatpush2.bf16.msra.mxu0 0
        %937 = vmatprep.subr.bf16.mxu0 0
        %938 = vmatpush2.bf16.msra.mxu0 0
        %939 = vmatprep.mubr.bf16.mxu0 0
        %940 = vmatmul.mubr.bf16.gmra.mxu0 %v902
        %v941 = vpop.f32.mrf.mxu0
        %v942 = vadd.f32 0.0, %v941
        %v943 = vpop.f32.mrf.mxu0
        %v944 = vpop.f32.mrf.mxu0
        %v945 = vpop.f32.mrf.mxu0
        %946 = vdwg.mxu0
        %v948 = vsel %vm347, %v894, 0
        %v951 = vsel %vm711, %v898, 0
        %953 = vmatprep.subr.bf16.mxu0 0
        %954 = vmatpush1.bf16.msra.mxu0 0
        %955 = vmatprep.subr.bf16.mxu0 0
        %956 = vmatpush1.bf16.msra.mxu0 0
        %957 = vmatprep.subr.bf16.mxu0 0
        %958 = vmatpush1.bf16.msra.mxu0 0
        %959 = vmatprep.subr.bf16.mxu0 0
        %960 = vmatpush1.bf16.msra.mxu0 0
        %961 = vmatprep.subr.bf16.mxu0 0
        %962 = vmatpush1.bf16.msra.mxu0 0
        %963 = vmatprep.subr.bf16.mxu0 0
        %964 = vmatpush1.bf16.msra.mxu0 0
        %965 = vmatprep.subr.bf16.mxu0 0
        %966 = vmatpush1.bf16.msra.mxu0 0
        %967 = vmatprep.subr.bf16.mxu0 0
        %968 = vmatpush1.bf16.msra.mxu0 %v951
        %969 = vmatprep.subr.bf16.mxu0 0
        %970 = vmatpush2.bf16.msra.mxu0 0
        %971 = vmatprep.subr.bf16.mxu0 0
        %972 = vmatpush2.bf16.msra.mxu0 0
        %973 = vmatprep.subr.bf16.mxu0 0
        %974 = vmatpush2.bf16.msra.mxu0 0
        %975 = vmatprep.subr.bf16.mxu0 0
        %976 = vmatpush2.bf16.msra.mxu0 0
        %977 = vmatprep.subr.bf16.mxu0 0
        %978 = vmatpush2.bf16.msra.mxu0 0
        %979 = vmatprep.subr.bf16.mxu0 0
        %980 = vmatpush2.bf16.msra.mxu0 0
        %981 = vmatprep.subr.bf16.mxu0 0
        %982 = vmatpush2.bf16.msra.mxu0 0
        %983 = vmatprep.subr.bf16.mxu0 0
        %984 = vmatpush2.bf16.msra.mxu0 0
        %985 = vmatprep.mubr.bf16.mxu0 0
        %986 = vmatmul.mubr.bf16.gmra.mxu0 %v948
        %v987 = vpop.f32.mrf.mxu0
        %v988 = vadd.f32 0.0, %v987
        %v989 = vpop.f32.mrf.mxu0
        %v990 = vpop.f32.mrf.mxu0
        %v991 = vpop.f32.mrf.mxu0
        %992 = vdwg.mxu0
        %v994 = vsel %vm347, %v895, 0
        %v997 = vsel %vm711, %v899, 0
        %999 = vmatprep.subr.bf16.mxu0 0
        %1000 = vmatpush1.bf16.msra.mxu0 0
        %1001 = vmatprep.subr.bf16.mxu0 0
        %1002 = vmatpush1.bf16.msra.mxu0 0
        %1003 = vmatprep.subr.bf16.mxu0 0
        %1004 = vmatpush1.bf16.msra.mxu0 0
        %1005 = vmatprep.subr.bf16.mxu0 0
        %1006 = vmatpush1.bf16.msra.mxu0 0
        %1007 = vmatprep.subr.bf16.mxu0 0
        %1008 = vmatpush1.bf16.msra.mxu0 0
        %1009 = vmatprep.subr.bf16.mxu0 0
        %1010 = vmatpush1.bf16.msra.mxu0 0
        %1011 = vmatprep.subr.bf16.mxu0 0
        %1012 = vmatpush1.bf16.msra.mxu0 0
        %1013 = vmatprep.subr.bf16.mxu0 0
        %1014 = vmatpush1.bf16.msra.mxu0 %v997
        %1015 = vmatprep.subr.bf16.mxu0 0
        %1016 = vmatpush2.bf16.msra.mxu0 0
        %1017 = vmatprep.subr.bf16.mxu0 0
        %1018 = vmatpush2.bf16.msra.mxu0 0
        %1019 = vmatprep.subr.bf16.mxu0 0
        %1020 = vmatpush2.bf16.msra.mxu0 0
        %1021 = vmatprep.subr.bf16.mxu0 0
        %1022 = vmatpush2.bf16.msra.mxu0 0
        %1023 = vmatprep.subr.bf16.mxu0 0
        %1024 = vmatpush2.bf16.msra.mxu0 0
        %1025 = vmatprep.subr.bf16.mxu0 0
        %1026 = vmatpush2.bf16.msra.mxu0 0
        %1027 = vmatprep.subr.bf16.mxu0 0
        %1028 = vmatpush2.bf16.msra.mxu0 0
        %1029 = vmatprep.subr.bf16.mxu0 0
        %1030 = vmatpush2.bf16.msra.mxu0 0
        %1031 = vmatprep.mubr.bf16.mxu0 0
        %1032 = vmatmul.mubr.bf16.gmra.mxu0 %v994
        %v1033 = vpop.f32.mrf.mxu0
        %v1034 = vadd.f32 0.0, %v1033
        %v1035 = vpop.f32.mrf.mxu0
        %v1036 = vpop.f32.mrf.mxu0
        %v1037 = vpop.f32.mrf.mxu0
        %1038 = vdwg.mxu0
        %v1040 = vsel %vm347, %v896, 0
        %v1043 = vsel %vm711, %v900, 0
        %1045 = vmatprep.subr.bf16.mxu0 0
        %1046 = vmatpush1.bf16.msra.mxu0 0
        %1047 = vmatprep.subr.bf16.mxu0 0
        %1048 = vmatpush1.bf16.msra.mxu0 0
        %1049 = vmatprep.subr.bf16.mxu0 0
        %1050 = vmatpush1.bf16.msra.mxu0 0
        %1051 = vmatprep.subr.bf16.mxu0 0
        %1052 = vmatpush1.bf16.msra.mxu0 0
        %1053 = vmatprep.subr.bf16.mxu0 0
        %1054 = vmatpush1.bf16.msra.mxu0 0
        %1055 = vmatprep.subr.bf16.mxu0 0
        %1056 = vmatpush1.bf16.msra.mxu0 0
        %1057 = vmatprep.subr.bf16.mxu0 0
        %1058 = vmatpush1.bf16.msra.mxu0 0
        %1059 = vmatprep.subr.bf16.mxu0 0
        %1060 = vmatpush1.bf16.msra.mxu0 %v1043
        %1061 = vmatprep.subr.bf16.mxu0 0
        %1062 = vmatpush2.bf16.msra.mxu0 0
        %1063 = vmatprep.subr.bf16.mxu0 0
        %1064 = vmatpush2.bf16.msra.mxu0 0
        %1065 = vmatprep.subr.bf16.mxu0 0
        %1066 = vmatpush2.bf16.msra.mxu0 0
        %1067 = vmatprep.subr.bf16.mxu0 0
        %1068 = vmatpush2.bf16.msra.mxu0 0
        %1069 = vmatprep.subr.bf16.mxu0 0
        %1070 = vmatpush2.bf16.msra.mxu0 0
        %1071 = vmatprep.subr.bf16.mxu0 0
        %1072 = vmatpush2.bf16.msra.mxu0 0
        %1073 = vmatprep.subr.bf16.mxu0 0
        %1074 = vmatpush2.bf16.msra.mxu0 0
        %1075 = vmatprep.subr.bf16.mxu0 0
        %1076 = vmatpush2.bf16.msra.mxu0 0
        %1077 = vmatprep.mubr.bf16.mxu0 0
        %1078 = vmatmul.mubr.bf16.gmra.mxu0 %v1040
        %v1079 = vpop.f32.mrf.mxu0
        %v1080 = vadd.f32 0.0, %v1079
        %v1081 = vpop.f32.mrf.mxu0
        %v1082 = vpop.f32.mrf.mxu0
        %v1083 = vpop.f32.mrf.mxu0
        %1084 = vdwg.mxu0
        %vm1085 = vcmask 261120
        %v1086 = vsel %vm1085, %v942, 0.0
        %v1087 = vsel %vm1085, %v988, 0.0
        %v1088 = vadd.f32 %v1086, %v1087
        %v1089 = vsel %vm1085, %v1034, 0.0
        %v1090 = vadd.f32 %v1088, %v1089
        %v1091 = vsel %vm1085, %v1080, 0.0
        %v1092 = vadd.f32 %v1090, %v1091
        %v1093 = vld [vmem:[%s333] sm:$0xff]
        %v1094 = vadd.f32 %v1092, %v1093
        %v1095 = vsel %vm1085, %v1094, 0.0
        %1096 = vadd.xlane.f32.xlu0 %v1095
        %v1097 = vpop.xlane.xlu0 %1096
        %v1098 = vrcp.pop 32.0
        %v1099 = vmul.f32 %v1097, %v1098
        %v1100 = vsub.f32 %v1094, %v1099
        %v1101 = vmul.f32 %v1100, %v1100
        %v1102 = vsel %vm1085, %v1101, 0.0
        %1103 = vadd.xlane.f32.xlu0 %v1102
        %v1104 = vpop.xlane.xlu0 %1103
        %v1105 = vmul.f32 %v1104, %v1098
        %v1106 = vadd.f32 %v1105, 1e-05
        %v1107 = vrsqrt.pop %v1106
        %v1108 = vmul.f32 %v1100, %v1107
        %v1109 = vld [vmem:[%s5] sm:$0x1]
        %v1111 = vlaneseq
        %v1112 = vshrl.u32 %v1111, 7
        %v1113 = vsub.s32 0, %v1112
        %v1114 = vrot.slane %v1109, %v1113
        %v1116 = vmul.f32 %v1108, %v1114
        %v1117 = vld [vmem:[%s6] sm:$0x1]
        %v1119 = vlaneseq
        %v1120 = vshrl.u32 %v1119, 7
        %v1121 = vsub.s32 0, %v1120
        %v1122 = vrot.slane %v1117, %v1121
        %v1124 = vadd.f32 %v1116, %v1122
        %1125 = vst.msk [vmem:[%s314] sm:$0xff] %vm1085, %v1124
        %s1126 = sand.u32 %s196, 1
        %s1127 = scalar_lea.sflag [#allocation3], %s1126
        %s1128 = sand.u32 %s196, 1
        %s1129 = smul.addr %s1128, 8
        %s1130 = scalar_lea.vmem [#allocation2], %s1129
        // Predicated region
        $region49: #{attention_forward.3} parent=47 // pred_check
          %p1131 = pneg %p206
        $region50: #{attention_forward.3} parent=47 // pred_check_branch
          %1133 = sbr.rel (%p1131) target = $region52
        $region51: #{attention_forward.3} parent=47 // pred_region
          %s1135 = ssub.s32 128, 128
          %1136 = vsyncadd %s1127, %s1135
          %s1137 = smul.addr %s21, 128
          %s1138 = scalar_lea.hbm %s7, %s1137
          %s1140 = sshll.u32 %s1130, 4
          %s1141 = int_to_ptr.vmem [resolvable:$true] %s1140
          %1143 = dma.vmem_to_hbm [thread:$0]  %s1141, 128, %s1138, %s1127
        $region52: #{attention_forward.3} parent=47 // pred_fallthru
          _
      $region48: #{attention_forward.3} parent=5 // pred_fallthru
        _
      %p1144 = scmp.le.s32.totalorder 2, %s16
      // Predicated region
      $region53: #{attention_forward.3} parent=5 // pred_check
        %p1145 = pneg %p1144
      $region54: #{attention_forward.3} parent=5 // pred_check_branch
        %1147 = sbr.rel (%p1145) target = $region56
      $region55: #{attention_forward.3} parent=5 // pred_region
        %s1148 = ssub.s32 %s16, 2
        // Predicated region
        $region57: #{attention_forward.3} parent=55 // pred_check
          %p1149 = pneg %p212
        $region58: #{attention_forward.3} parent=55 // pred_check_branch
          %1151 = sbr.rel (%p1149) target = $region60
        $region59: #{attention_forward.3} parent=55 // pred_region
          %s1152 = sand.u32 %s197, 1
          %s1153 = scalar_lea.sflag [#allocation3], %s1152
          %s1154 = sand.u32 %s197, 1
          %s1155 = smul.addr %s1154, 8
          %s1156 = scalar_lea.vmem [#allocation2], %s1155
          %1157 = dma.done %s1153, 128
        $region60: #{attention_forward.3} parent=55 // pred_fallthru
          _
      $region56: #{attention_forward.3} parent=5 // pred_fallthru
        _
    $region6: #{attention_forward.3} parent=1 // loop_footer
      %s20 = sadd.s32 1, %s16
    $region7: #{attention_forward.3} parent=1 // loop_footer_branch
      %15 = sbr.rel target = $region3
    $region8: #{attention_forward.3} parent=1 // loop_exit
      _
    %1158 = vsyncpa [#allocation3], 1
    %s1159 = scalar_lea.sflag [#allocation3], 1
    %1160 = vsyncpa %s1159, 1

</llo_original>
